<compile_context>
chip_gen: v7x
topology: tpu7x:2x2x1
jax: 0.10.0
libtpu: 0.0.40
codegen_flags: <defaults>
</compile_context>

<pallas_src>
import functools

import jax
import jax.numpy as jnp
from jax.experimental import pallas as pl
from jax.experimental.pallas import tpu as pltpu

NUM_CS_GROUPS = 9       # cs_mean_, cs_var_, cs_ever_measured_, cs_mean_indicators_,
                        # cs_var_indicators_, cs_switches_, cs_slope_,
                        # cs_hours_above_threshold_, cs_hours_below_threshold_
NUM_FEAT_GROUPS = 12    # summary groups concatenated after feats_time_5


def _lr_summaries_kernel(x_ref, m_ref, pb5_ref, wv_ref, scal_ref, wt5_ref,
                         wg_ref, b_ref, out_ref, *, T, inv_tt, eps, approx_rcp):
    """One batch tile; lanes = batch.

    x_ref   : (T, C, TB)      changing variables
    m_ref   : (T, C, TB)      measurement indicators (binary 0/1)
    pb5_ref : (D, TB)         patient_batch[:, 5, :].T
    wv_ref  : (10, T, C, 1)   sigmoid cutoff weights per cs group; row 9 = row 1 ** 2
    scal_ref: (8, C, 1)       [1/mean_den, 1/em_den, 1/mi_den, 1/(vi_norm+eps),
                               1/sw_den, 1/slope_wden, upper/tt, lower/tt]
    wt5_ref : (2, D, 1)       linear weights for feats_time_5, per output row
    wg_ref  : (2, 12, C, 1)   linear weights for the 12 summary groups
    b_ref   : (2, 1)          linear bias
    out_ref : (2, TB)         logits (lane dense)
    """
    f32 = jnp.float32

    def rcp(v):
        # approx=True moves these divides onto the EUP approx-reciprocal path;
        # default is exact to keep the correctness check tight.
        return pl.reciprocal(v, approx=approx_rcp)

    xs = [x_ref[t] for t in range(T)]              # each (C, TB)
    ms = [m_ref[t] for t in range(T)]
    xms = [xs[t] * ms[t] for t in range(T)]

    # Batch-independent cutoff weights, hoisted into a tiny constant input.
    w = [[wv_ref[g, t] for t in range(T)] for g in range(NUM_CS_GROUPS + 1)]

    def tsum(fn, t0=0, t1=T):
        acc = fn(t0)
        for t in range(t0 + 1, t1):
            acc = acc + fn(t)
        return acc

    inv_T = f32(1.0 / T)
    r_mean, r_em, r_mi, r_vin, r_sw, r_slw, up_tt, low_tt = (
        scal_ref[k] for k in range(8))

    # --- mean features ---
    mean_feats = tsum(lambda t: w[0][t] * xms[t]) * r_mean

    # --- variance features ---
    x_mean = tsum(lambda t: xms[t]) * inv_T
    mw = [ms[t] * w[1][t] for t in range(T)]
    weighted_var = tsum(lambda t: mw[t] * (xs[t] - x_mean) ** 2)
    s_mvw = tsum(lambda t: mw[t])
    s_mv2 = tsum(lambda t: ms[t] * w[9][t])        # m * var_w**2 (w**2 precomputed)
    s2 = s_mvw * s_mvw
    norm_term = s2 * rcp(s2 + s_mv2 + eps)
    var_feats = weighted_var * rcp(norm_term + eps)

    # --- ever-measured features ---
    em_feats = jax.nn.sigmoid(tsum(lambda t: w[2][t] * ms[t]) * r_em) - 0.5

    # --- mean-of-indicator features ---
    mi_feats = tsum(lambda t: w[3][t] * ms[t]) * r_mi

    # --- variance-of-indicator features ---
    m_mean = tsum(lambda t: ms[t]) * inv_T
    vi_feats = tsum(lambda t: w[4][t] * (ms[t] - m_mean) ** 2) * r_vin

    # --- switch features ---
    sw_feats = tsum(lambda t: w[5][t] * jnp.abs(xs[t + 1] - xs[t]), 0, T - 1) * r_sw

    # --- first / last time measured (unrolled running arg-max selects) ---
    best_v = ms[T - 1]
    best_i = jnp.full_like(best_v, f32(T - 1))
    for t in range(T - 2, -1, -1):                 # ">=": first occurrence of the max
        take = ms[t] >= best_v
        best_i = jnp.where(take, f32(t), best_i)
        best_v = jnp.maximum(ms[t], best_v)
    first_feats = jnp.where(best_v == 0.0, f32(-1.0), best_i) * inv_T

    lbv = ms[0]
    lbi = jnp.zeros_like(lbv)
    for t in range(1, T):                          # last occurrence of the max
        take = ms[t] >= lbv
        lbi = jnp.where(take, f32(t), lbi)
        lbv = jnp.maximum(ms[t], lbv)
    idx2 = jnp.where(lbv == 0.0, f32(T), f32(T - 1) - lbi)
    last_feats = (f32(T) - idx2) * inv_T

    # --- slope + slope stderr features ---
    lx = [ms[t] * f32(t) for t in range(T)]
    wx = tsum(lambda t: w[6][t] * lx[t]) * r_slw
    wy = tsum(lambda t: w[6][t] * xms[t]) * r_slw
    slope_num = tsum(lambda t: w[6][t] * (lx[t] - wx) * (xms[t] - wy))
    slope_den = tsum(lambda t: w[6][t] * (lx[t] - wx) ** 2)
    inv_den = rcp(slope_den + eps)
    slope_feats = slope_num * inv_den
    slope_stderr_feats = jnp.where(slope_den > 0, inv_den, slope_den)

    # --- hours above / below threshold features ---
    at_num = tsum(lambda t: ms[t] * w[7][t] * jax.nn.sigmoid(xs[t] * inv_tt - up_tt))
    at_den = tsum(lambda t: ms[t] * w[7][t])
    bt_num = tsum(lambda t: ms[t] * w[8][t] * jax.nn.sigmoid(low_tt - xs[t] * inv_tt))
    bt_den = tsum(lambda t: ms[t] * w[8][t])
    above_feats = at_num * rcp(at_den + eps)
    below_feats = bt_num * rcp(bt_den + eps)

    groups = (mean_feats, var_feats, em_feats, mi_feats, vi_feats, sw_feats,
              slope_feats, slope_stderr_feats, first_feats, last_feats,
              above_feats, below_feats)

    # --- final linear layer: pure-VPU MAC into a lane-dense (2, TB) result ---
    pb5 = pb5_ref[...]                             # (D, TB)
    rows = []
    for o in range(2):
        acc_c = wg_ref[o, 0] * groups[0]
        for g in range(1, NUM_FEAT_GROUPS):
            acc_c = acc_c + wg_ref[o, g] * groups[g]
        acc_d = wt5_ref[o] * pb5
        rows.append(jnp.sum(acc_c, axis=0, keepdims=True)
                    + jnp.sum(acc_d, axis=0, keepdims=True))
    logits = jnp.concatenate(rows, axis=0) + b_ref[...]
    out_ref[...] = logits.astype(out_ref.dtype)


def lr_with_summaries_forward(patient_batch, params, *, changing_dim, time_len=6,
                              cutoff_times_temperature=1.0,
                              thresholds_temperature=0.1,
                              ever_measured_temperature=0.1,
                              epsilon_denom=0.01,
                              batch_tile=1024,          # v6e: can go 4096-8192; v7x keep <=2048
                              use_approx_reciprocal=False):
    """Pallas-backed forward pass; layout plumbing and constant folding stay in JAX."""
    C, T = changing_dim, time_len
    B, T_in, D = patient_batch.shape
    assert T_in == T
    eps = float(epsilon_denom)
    pb = patient_batch.astype(jnp.float32)

    # Batch-on-lanes layout.
    x = jnp.transpose(pb[:, :, :C], (1, 2, 0))          # (T, C, B)
    m = jnp.transpose(pb[:, :, C:2 * C], (1, 2, 0))     # (T, C, B)
    pb5 = pb[:, 5, :].T                                  # (D, B)

    # Pad batch to a lane-aligned multiple of the batch tile.
    B128 = ((B + 127) // 128) * 128
    tile_b = max(128, (min(int(batch_tile), B128) // 128) * 128)
    B_pad = ((B128 + tile_b - 1) // tile_b) * tile_b
    pad_b = B_pad - B
    if pad_b:
        x = jnp.pad(x, ((0, 0), (0, 0), (0, pad_b)))
        m = jnp.pad(m, ((0, 0), (0, 0), (0, pad_b)))
        pb5 = jnp.pad(pb5, ((0, 0), (0, pad_b)))

    # ---- batch-independent precomputation (hoisted out of the kernel) ----
    t_vec = jnp.arange(T, dtype=jnp.float32)[:, None]                     # (T, 1)
    cut = params["cutoff_times"].reshape(NUM_CS_GROUPS, C).astype(jnp.float32)
    wv = jax.nn.sigmoid((t_vec[None] - cut[:, None, :]) / cutoff_times_temperature)  # (9,T,C)
    wv_all = jnp.concatenate([wv, wv[1:2] ** 2], axis=0)[..., None]       # (10,T,C,1)

    r_mean = 1.0 / (wv[0].sum(0) + eps)
    r_em = 1.0 / (ever_measured_temperature * wv[2].sum(0) + eps)
    r_mi = 1.0 / (wv[3].sum(0) + eps)
    s_vi = wv[4].sum(0)
    norm_i = s_vi ** 2 / (s_vi ** 2 + (wv[4] ** 2).sum(0) + eps)
    r_vin = 1.0 / (norm_i + eps)
    r_sw = 1.0 / (wv[5][:-1].sum(0) + eps)
    r_slw = 1.0 / (wv[6].sum(0) + eps)
    up_tt = params["upper_thresholds"].astype(jnp.float32) / thresholds_temperature
    low_tt = params["lower_thresholds"].astype(jnp.float32) / thresholds_temperature
    scal = jnp.stack([r_mean, r_em, r_mi, r_vin, r_sw, r_slw, up_tt, low_tt],
                     axis=0)[..., None]                                   # (8, C, 1)

    wlin = params["linear_w"].astype(jnp.float32)                         # (2, D+12C)
    wt5 = wlin[:, :D][..., None]                                          # (2, D, 1)
    wg = wlin[:, D:].reshape(2, NUM_FEAT_GROUPS, C)[..., None]            # (2,12,C,1)
    bias = params["linear_b"].reshape(2, 1).astype(jnp.float32)           # (2, 1)

    kernel = functools.partial(
        _lr_summaries_kernel, T=T, inv_tt=1.0 / thresholds_temperature,
        eps=eps, approx_rcp=use_approx_reciprocal)

    out = pl.pallas_call(
        kernel,
        out_shape=jax.ShapeDtypeStruct((2, B_pad), jnp.float32),
        grid=(B_pad // tile_b,),
        in_specs=[
            pl.BlockSpec((T, C, tile_b), lambda i: (0, 0, i)),            # x
            pl.BlockSpec((T, C, tile_b), lambda i: (0, 0, i)),            # m
            pl.BlockSpec((D, tile_b), lambda i: (0, i)),                  # pb5
            pl.BlockSpec((NUM_CS_GROUPS + 1, T, C, 1),
                         lambda i: (0, 0, 0, 0)),                         # wv_all
            pl.BlockSpec((8, C, 1), lambda i: (0, 0, 0)),                 # scal
            pl.BlockSpec((2, D, 1), lambda i: (0, 0, 0)),                 # wt5
            pl.BlockSpec((2, NUM_FEAT_GROUPS, C, 1),
                         lambda i: (0, 0, 0, 0)),                         # wg
            pl.BlockSpec((2, 1), lambda i: (0, 0)),                       # bias
        ],
        out_specs=pl.BlockSpec((2, tile_b), lambda i: (0, i)),
        compiler_params=pltpu.CompilerParams(
            dimension_semantics=("parallel",),
            vmem_limit_bytes=32 * 1024 * 1024),
    )(x, m, pb5, wv_all, scal, wt5, wg, bias)

    return out[:, :B].T                                                   # (B, 2)


def reference_forward(patient_batch, params, *, changing_dim, time_len=6,
                      cutoff_times_temperature=1.0, thresholds_temperature=0.1,
                      ever_measured_temperature=0.1, epsilon_denom=0.01):
    """Pure-JAX transcription of the PyTorch forward, for correctness check."""
    C, T = changing_dim, time_len
    eps = epsilon_denom
    pb = patient_batch.astype(jnp.float32)
    x = pb[:, :, :C]
    m = pb[:, :, C:2 * C]

    times = jnp.tile(jnp.arange(T, dtype=jnp.float32)[:, None], (1, C))
    times = jnp.tile(times, (1, NUM_CS_GROUPS))
    cutoffs = params["cutoff_times"].reshape(1, NUM_CS_GROUPS * C)
    wv = jax.nn.sigmoid((times - cutoffs) / cutoff_times_temperature)[None]

    def sl(g):
        return wv[:, :, g * C:(g + 1) * C]

    xm = x * m
    mean_feats = jnp.sum(sl(0) * xm, axis=1) / (jnp.sum(sl(0), axis=1) + eps)

    x_mean = jnp.mean(xm, axis=1, keepdims=True)
    var_w = sl(1)
    weighted_variance = jnp.sum(m * var_w * (x - x_mean) ** 2, axis=1)
    s_mvw = jnp.sum(m * var_w, axis=1)
    norm_term = s_mvw ** 2 / (s_mvw ** 2 + jnp.sum(m * var_w ** 2, axis=1) + eps)
    var_feats = weighted_variance / (norm_term + eps)

    em_w = sl(2)
    em_feats = jax.nn.sigmoid(
        jnp.sum(em_w * m, axis=1) /
        (ever_measured_temperature * jnp.sum(em_w, axis=1) + eps)) - 0.5

    mi_w = sl(3)
    mi_feats = jnp.sum(mi_w * m, axis=1) / (jnp.sum(mi_w, axis=1) + eps)

    vi_w = sl(4)
    m_mean = jnp.mean(m, axis=1, keepdims=True)
    wvar_ind = jnp.sum(vi_w * (m - m_mean) ** 2, axis=1)
    s_vi = jnp.sum(vi_w, axis=1)
    norm_term_i = s_vi ** 2 / (s_vi ** 2 + jnp.sum(vi_w ** 2, axis=1) + eps)
    vi_feats = wvar_ind / (norm_term_i + eps)

    sw_w = sl(5)[:, :-1, :]
    sw_feats = jnp.sum(sw_w * jnp.abs(x[:, 1:, :] - x[:, :-1, :]), axis=1) / (
        jnp.sum(sw_w, axis=1) + eps)

    maxv = jnp.max(m, axis=1)
    idx = jnp.argmax(m, axis=1).astype(jnp.float32)
    idx = jnp.where(maxv == 0, -1.0, idx)
    first_feats = idx / float(T)
    flipped = m[:, ::-1, :]
    maxv2 = jnp.max(flipped, axis=1)
    idx2 = jnp.argmax(flipped, axis=1).astype(jnp.float32)
    idx2 = jnp.where(maxv2 == 0, float(T), idx2)
    last_feats = (float(T) - idx2) / float(T)

    slope_w = sl(6)
    lin_y = xm
    lin_x = jnp.tile(jnp.arange(T, dtype=jnp.float32)[None, :, None],
                     (pb.shape[0], 1, C)) * m
    s_slw = jnp.sum(slope_w, axis=1) + eps
    wx = (jnp.sum(slope_w * lin_x, axis=1) / s_slw)[:, None, :]
    wy = (jnp.sum(slope_w * lin_y, axis=1) / s_slw)[:, None, :]
    slope_num = jnp.sum(slope_w * (lin_x - wx) * (lin_y - wy), axis=1)
    slope_den = jnp.sum(slope_w * (lin_x - wx) ** 2, axis=1)
    slope_feats = slope_num / (slope_den + eps)
    slope_stderr_feats = jnp.where(slope_den > 0, 1.0 / (slope_den + eps), slope_den)

    at_w, bt_w = sl(7), sl(8)
    upper_f = jax.nn.sigmoid(
        (x - params["upper_thresholds"][None, None, :]) / thresholds_temperature)
    lower_f = jax.nn.sigmoid(
        (params["lower_thresholds"][None, None, :] - x) / thresholds_temperature)
    above_feats = jnp.sum(m * at_w * upper_f, axis=1) / (
        jnp.sum(m * at_w, axis=1) + eps)
    below_feats = jnp.sum(m * bt_w * lower_f, axis=1) / (
        jnp.sum(m * bt_w, axis=1) + eps)

    cat = jnp.concatenate(
        [pb[:, 5, :], mean_feats, var_feats, em_feats, mi_feats, vi_feats,
         sw_feats, slope_feats, slope_stderr_feats, first_feats, last_feats,
         above_feats, below_feats], axis=1)
    return cat @ params["linear_w"].T + params["linear_b"][None, :]


if __name__ == "__main__":
    B = 2
    time_len = 6
    changing_dim = 4
    input_dim = 2 * changing_dim + 2        # changing vars + indicators + 2 static
    num_weights = input_dim + NUM_FEAT_GROUPS * changing_dim   # = 58

    key = jax.random.PRNGKey(0)
    k1, k2, k3, k4, k5, k6, k7, k8 = jax.random.split(key, 8)

    # Deterministic synthetic input: (B, T, D) with binary measurement indicators.
    xvals = jax.random.normal(k1, (B, time_len, changing_dim), jnp.float32)
    inds = jax.random.bernoulli(k2, 0.7, (B, time_len, changing_dim)).astype(jnp.float32)
    static = jax.random.normal(k3, (B, time_len, input_dim - 2 * changing_dim),
                               jnp.float32)
    patient_batch = jnp.concatenate([xvals, inds, static], axis=-1)

    params = {
        "cutoff_times": jax.random.uniform(
            k4, (1, changing_dim * NUM_CS_GROUPS), jnp.float32, 0.0, float(time_len)),
        "lower_thresholds": jax.random.normal(k5, (changing_dim,), jnp.float32) * 0.5 - 0.5,
        "upper_thresholds": jax.random.normal(k6, (changing_dim,), jnp.float32) * 0.5 + 0.5,
        "linear_w": jax.random.normal(k7, (2, num_weights), jnp.float32) * 0.1,
        "linear_b": jax.random.normal(k8, (2,), jnp.float32) * 0.1,
    }

    out = lr_with_summaries_forward(patient_batch, params,
                                    changing_dim=changing_dim, time_len=time_len)
    out = jax.block_until_ready(out)

    ref = reference_forward(patient_batch, params,
                            changing_dim=changing_dim, time_len=time_len)
    ref = jax.block_until_ready(ref)

    assert out.shape == (B, 2)
    assert jnp.allclose(out, ref, rtol=2e-3, atol=2e-3), (out, ref)
    print("KERNEL_OK")
</pallas_src>

<mosaic_0001>
module attributes {stable_mosaic.version = 11 : i64} {
  func.func @_lr_summaries_kernel(%arg0: i32, %arg1: memref<6x4x128xf32, #tpu.memory_space<vmem>>, %arg2: memref<6x4x128xf32, #tpu.memory_space<vmem>>, %arg3: memref<10x128xf32, #tpu.memory_space<vmem>>, %arg4: memref<10x6x4x1xf32, #tpu.memory_space<vmem>>, %arg5: memref<8x4x1xf32, #tpu.memory_space<vmem>>, %arg6: memref<2x10x1xf32, #tpu.memory_space<vmem>>, %arg7: memref<2x12x4x1xf32, #tpu.memory_space<vmem>>, %arg8: memref<2x1xf32, #tpu.memory_space<vmem>>, %arg9: memref<2x128xf32, #tpu.memory_space<vmem>>) attributes {dimension_semantics = [#tpu.dimension_semantics<parallel>], iteration_bounds = array<i64: 1>, scalar_prefetch = 0 : i64, scratch_operands = 0 : i64, tpu.core_type = #tpu.core_type<tc>, window_params = [{transform_indices = @transform_0, window_bounds = array<i64: 6, 4, 128>}, {transform_indices = @transform_1, window_bounds = array<i64: 6, 4, 128>}, {transform_indices = @transform_2, window_bounds = array<i64: 10, 128>}, {pipeline_mode = #tpu.pipeline_mode<synchronous>, transform_indices = @transform_3, window_bounds = array<i64: 10, 6, 4, 1>}, {pipeline_mode = #tpu.pipeline_mode<synchronous>, transform_indices = @transform_4, window_bounds = array<i64: 8, 4, 1>}, {pipeline_mode = #tpu.pipeline_mode<synchronous>, transform_indices = @transform_5, window_bounds = array<i64: 2, 10, 1>}, {pipeline_mode = #tpu.pipeline_mode<synchronous>, transform_indices = @transform_6, window_bounds = array<i64: 2, 12, 4, 1>}, {pipeline_mode = #tpu.pipeline_mode<synchronous>, transform_indices = @transform_7, window_bounds = array<i64: 2, 1>}, {transform_indices = @transform_8, window_bounds = array<i64: 2, 128>}]} {
    %c0 = arith.constant 0 : index
    %c0_0 = arith.constant 0 : index
    %c0_1 = arith.constant 0 : index
    %0 = vector.load %arg1[%c0, %c0_0, %c0_1] : memref<6x4x128xf32, #tpu.memory_space<vmem>>, vector<1x4x128xf32>
    %1 = vector.shape_cast %0 : vector<1x4x128xf32> to vector<4x128xf32>
    %c1 = arith.constant 1 : index
    %c0_2 = arith.constant 0 : index
    %c0_3 = arith.constant 0 : index
    %2 = vector.load %arg1[%c1, %c0_2, %c0_3] : memref<6x4x128xf32, #tpu.memory_space<vmem>>, vector<1x4x128xf32>
    %3 = vector.shape_cast %2 : vector<1x4x128xf32> to vector<4x128xf32>
    %c2 = arith.constant 2 : index
    %c0_4 = arith.constant 0 : index
    %c0_5 = arith.constant 0 : index
    %4 = vector.load %arg1[%c2, %c0_4, %c0_5] : memref<6x4x128xf32, #tpu.memory_space<vmem>>, vector<1x4x128xf32>
    %5 = vector.shape_cast %4 : vector<1x4x128xf32> to vector<4x128xf32>
    %c3 = arith.constant 3 : index
    %c0_6 = arith.constant 0 : index
    %c0_7 = arith.constant 0 : index
    %6 = vector.load %arg1[%c3, %c0_6, %c0_7] : memref<6x4x128xf32, #tpu.memory_space<vmem>>, vector<1x4x128xf32>
    %7 = vector.shape_cast %6 : vector<1x4x128xf32> to vector<4x128xf32>
    %c4 = arith.constant 4 : index
    %c0_8 = arith.constant 0 : index
    %c0_9 = arith.constant 0 : index
    %8 = vector.load %arg1[%c4, %c0_8, %c0_9] : memref<6x4x128xf32, #tpu.memory_space<vmem>>, vector<1x4x128xf32>
    %9 = vector.shape_cast %8 : vector<1x4x128xf32> to vector<4x128xf32>
    %c5 = arith.constant 5 : index
    %c0_10 = arith.constant 0 : index
    %c0_11 = arith.constant 0 : index
    %10 = vector.load %arg1[%c5, %c0_10, %c0_11] : memref<6x4x128xf32, #tpu.memory_space<vmem>>, vector<1x4x128xf32>
    %11 = vector.shape_cast %10 : vector<1x4x128xf32> to vector<4x128xf32>
    %c0_12 = arith.constant 0 : index
    %c0_13 = arith.constant 0 : index
    %c0_14 = arith.constant 0 : index
    %12 = vector.load %arg2[%c0_12, %c0_13, %c0_14] : memref<6x4x128xf32, #tpu.memory_space<vmem>>, vector<1x4x128xf32>
    %13 = vector.shape_cast %12 : vector<1x4x128xf32> to vector<4x128xf32>
    %c1_15 = arith.constant 1 : index
    %c0_16 = arith.constant 0 : index
    %c0_17 = arith.constant 0 : index
    %14 = vector.load %arg2[%c1_15, %c0_16, %c0_17] : memref<6x4x128xf32, #tpu.memory_space<vmem>>, vector<1x4x128xf32>
    %15 = vector.shape_cast %14 : vector<1x4x128xf32> to vector<4x128xf32>
    %c2_18 = arith.constant 2 : index
    %c0_19 = arith.constant 0 : index
    %c0_20 = arith.constant 0 : index
    %16 = vector.load %arg2[%c2_18, %c0_19, %c0_20] : memref<6x4x128xf32, #tpu.memory_space<vmem>>, vector<1x4x128xf32>
    %17 = vector.shape_cast %16 : vector<1x4x128xf32> to vector<4x128xf32>
    %c3_21 = arith.constant 3 : index
    %c0_22 = arith.constant 0 : index
    %c0_23 = arith.constant 0 : index
    %18 = vector.load %arg2[%c3_21, %c0_22, %c0_23] : memref<6x4x128xf32, #tpu.memory_space<vmem>>, vector<1x4x128xf32>
    %19 = vector.shape_cast %18 : vector<1x4x128xf32> to vector<4x128xf32>
    %c4_24 = arith.constant 4 : index
    %c0_25 = arith.constant 0 : index
    %c0_26 = arith.constant 0 : index
    %20 = vector.load %arg2[%c4_24, %c0_25, %c0_26] : memref<6x4x128xf32, #tpu.memory_space<vmem>>, vector<1x4x128xf32>
    %21 = vector.shape_cast %20 : vector<1x4x128xf32> to vector<4x128xf32>
    %c5_27 = arith.constant 5 : index
    %c0_28 = arith.constant 0 : index
    %c0_29 = arith.constant 0 : index
    %22 = vector.load %arg2[%c5_27, %c0_28, %c0_29] : memref<6x4x128xf32, #tpu.memory_space<vmem>>, vector<1x4x128xf32>
    %23 = vector.shape_cast %22 : vector<1x4x128xf32> to vector<4x128xf32>
    %24 = arith.mulf %1, %13 : vector<4x128xf32>
    %25 = arith.mulf %3, %15 : vector<4x128xf32>
    %26 = arith.mulf %5, %17 : vector<4x128xf32>
    %27 = arith.mulf %7, %19 : vector<4x128xf32>
    %28 = arith.mulf %9, %21 : vector<4x128xf32>
    %29 = arith.mulf %11, %23 : vector<4x128xf32>
    %c0_30 = arith.constant 0 : index
    %c0_31 = arith.constant 0 : index
    %c0_32 = arith.constant 0 : index
    %c0_33 = arith.constant 0 : index
    %30 = vector.load %arg4[%c0_30, %c0_31, %c0_32, %c0_33] : memref<10x6x4x1xf32, #tpu.memory_space<vmem>>, vector<1x1x4x1xf32>
    %31 = vector.shape_cast %30 : vector<1x1x4x1xf32> to vector<4x1xf32>
    %c0_34 = arith.constant 0 : index
    %c1_35 = arith.constant 1 : index
    %c0_36 = arith.constant 0 : index
    %c0_37 = arith.constant 0 : index
    %32 = vector.load %arg4[%c0_34, %c1_35, %c0_36, %c0_37] : memref<10x6x4x1xf32, #tpu.memory_space<vmem>>, vector<1x1x4x1xf32>
    %33 = vector.shape_cast %32 : vector<1x1x4x1xf32> to vector<4x1xf32>
    %c0_38 = arith.constant 0 : index
    %c2_39 = arith.constant 2 : index
    %c0_40 = arith.constant 0 : index
    %c0_41 = arith.constant 0 : index
    %34 = vector.load %arg4[%c0_38, %c2_39, %c0_40, %c0_41] : memref<10x6x4x1xf32, #tpu.memory_space<vmem>>, vector<1x1x4x1xf32>
    %35 = vector.shape_cast %34 : vector<1x1x4x1xf32> to vector<4x1xf32>
    %c0_42 = arith.constant 0 : index
    %c3_43 = arith.constant 3 : index
    %c0_44 = arith.constant 0 : index
    %c0_45 = arith.constant 0 : index
    %36 = vector.load %arg4[%c0_42, %c3_43, %c0_44, %c0_45] : memref<10x6x4x1xf32, #tpu.memory_space<vmem>>, vector<1x1x4x1xf32>
    %37 = vector.shape_cast %36 : vector<1x1x4x1xf32> to vector<4x1xf32>
    %c0_46 = arith.constant 0 : index
    %c4_47 = arith.constant 4 : index
    %c0_48 = arith.constant 0 : index
    %c0_49 = arith.constant 0 : index
    %38 = vector.load %arg4[%c0_46, %c4_47, %c0_48, %c0_49] : memref<10x6x4x1xf32, #tpu.memory_space<vmem>>, vector<1x1x4x1xf32>
    %39 = vector.shape_cast %38 : vector<1x1x4x1xf32> to vector<4x1xf32>
    %c0_50 = arith.constant 0 : index
    %c5_51 = arith.constant 5 : index
    %c0_52 = arith.constant 0 : index
    %c0_53 = arith.constant 0 : index
    %40 = vector.load %arg4[%c0_50, %c5_51, %c0_52, %c0_53] : memref<10x6x4x1xf32, #tpu.memory_space<vmem>>, vector<1x1x4x1xf32>
    %41 = vector.shape_cast %40 : vector<1x1x4x1xf32> to vector<4x1xf32>
    %c1_54 = arith.constant 1 : index
    %c0_55 = arith.constant 0 : index
    %c0_56 = arith.constant 0 : index
    %c0_57 = arith.constant 0 : index
    %42 = vector.load %arg4[%c1_54, %c0_55, %c0_56, %c0_57] : memref<10x6x4x1xf32, #tpu.memory_space<vmem>>, vector<1x1x4x1xf32>
    %43 = vector.shape_cast %42 : vector<1x1x4x1xf32> to vector<4x1xf32>
    %c1_58 = arith.constant 1 : index
    %c1_59 = arith.constant 1 : index
    %c0_60 = arith.constant 0 : index
    %c0_61 = arith.constant 0 : index
    %44 = vector.load %arg4[%c1_58, %c1_59, %c0_60, %c0_61] : memref<10x6x4x1xf32, #tpu.memory_space<vmem>>, vector<1x1x4x1xf32>
    %45 = vector.shape_cast %44 : vector<1x1x4x1xf32> to vector<4x1xf32>
    %c1_62 = arith.constant 1 : index
    %c2_63 = arith.constant 2 : index
    %c0_64 = arith.constant 0 : index
    %c0_65 = arith.constant 0 : index
    %46 = vector.load %arg4[%c1_62, %c2_63, %c0_64, %c0_65] : memref<10x6x4x1xf32, #tpu.memory_space<vmem>>, vector<1x1x4x1xf32>
    %47 = vector.shape_cast %46 : vector<1x1x4x1xf32> to vector<4x1xf32>
    %c1_66 = arith.constant 1 : index
    %c3_67 = arith.constant 3 : index
    %c0_68 = arith.constant 0 : index
    %c0_69 = arith.constant 0 : index
    %48 = vector.load %arg4[%c1_66, %c3_67, %c0_68, %c0_69] : memref<10x6x4x1xf32, #tpu.memory_space<vmem>>, vector<1x1x4x1xf32>
    %49 = vector.shape_cast %48 : vector<1x1x4x1xf32> to vector<4x1xf32>
    %c1_70 = arith.constant 1 : index
    %c4_71 = arith.constant 4 : index
    %c0_72 = arith.constant 0 : index
    %c0_73 = arith.constant 0 : index
    %50 = vector.load %arg4[%c1_70, %c4_71, %c0_72, %c0_73] : memref<10x6x4x1xf32, #tpu.memory_space<vmem>>, vector<1x1x4x1xf32>
    %51 = vector.shape_cast %50 : vector<1x1x4x1xf32> to vector<4x1xf32>
    %c1_74 = arith.constant 1 : index
    %c5_75 = arith.constant 5 : index
    %c0_76 = arith.constant 0 : index
    %c0_77 = arith.constant 0 : index
    %52 = vector.load %arg4[%c1_74, %c5_75, %c0_76, %c0_77] : memref<10x6x4x1xf32, #tpu.memory_space<vmem>>, vector<1x1x4x1xf32>
    %53 = vector.shape_cast %52 : vector<1x1x4x1xf32> to vector<4x1xf32>
    %c2_78 = arith.constant 2 : index
    %c0_79 = arith.constant 0 : index
    %c0_80 = arith.constant 0 : index
    %c0_81 = arith.constant 0 : index
    %54 = vector.load %arg4[%c2_78, %c0_79, %c0_80, %c0_81] : memref<10x6x4x1xf32, #tpu.memory_space<vmem>>, vector<1x1x4x1xf32>
    %55 = vector.shape_cast %54 : vector<1x1x4x1xf32> to vector<4x1xf32>
    %c2_82 = arith.constant 2 : index
    %c1_83 = arith.constant 1 : index
    %c0_84 = arith.constant 0 : index
    %c0_85 = arith.constant 0 : index
    %56 = vector.load %arg4[%c2_82, %c1_83, %c0_84, %c0_85] : memref<10x6x4x1xf32, #tpu.memory_space<vmem>>, vector<1x1x4x1xf32>
    %57 = vector.shape_cast %56 : vector<1x1x4x1xf32> to vector<4x1xf32>
    %c2_86 = arith.constant 2 : index
    %c2_87 = arith.constant 2 : index
    %c0_88 = arith.constant 0 : index
    %c0_89 = arith.constant 0 : index
    %58 = vector.load %arg4[%c2_86, %c2_87, %c0_88, %c0_89] : memref<10x6x4x1xf32, #tpu.memory_space<vmem>>, vector<1x1x4x1xf32>
    %59 = vector.shape_cast %58 : vector<1x1x4x1xf32> to vector<4x1xf32>
    %c2_90 = arith.constant 2 : index
    %c3_91 = arith.constant 3 : index
    %c0_92 = arith.constant 0 : index
    %c0_93 = arith.constant 0 : index
    %60 = vector.load %arg4[%c2_90, %c3_91, %c0_92, %c0_93] : memref<10x6x4x1xf32, #tpu.memory_space<vmem>>, vector<1x1x4x1xf32>
    %61 = vector.shape_cast %60 : vector<1x1x4x1xf32> to vector<4x1xf32>
    %c2_94 = arith.constant 2 : index
    %c4_95 = arith.constant 4 : index
    %c0_96 = arith.constant 0 : index
    %c0_97 = arith.constant 0 : index
    %62 = vector.load %arg4[%c2_94, %c4_95, %c0_96, %c0_97] : memref<10x6x4x1xf32, #tpu.memory_space<vmem>>, vector<1x1x4x1xf32>
    %63 = vector.shape_cast %62 : vector<1x1x4x1xf32> to vector<4x1xf32>
    %c2_98 = arith.constant 2 : index
    %c5_99 = arith.constant 5 : index
    %c0_100 = arith.constant 0 : index
    %c0_101 = arith.constant 0 : index
    %64 = vector.load %arg4[%c2_98, %c5_99, %c0_100, %c0_101] : memref<10x6x4x1xf32, #tpu.memory_space<vmem>>, vector<1x1x4x1xf32>
    %65 = vector.shape_cast %64 : vector<1x1x4x1xf32> to vector<4x1xf32>
    %c3_102 = arith.constant 3 : index
    %c0_103 = arith.constant 0 : index
    %c0_104 = arith.constant 0 : index
    %c0_105 = arith.constant 0 : index
    %66 = vector.load %arg4[%c3_102, %c0_103, %c0_104, %c0_105] : memref<10x6x4x1xf32, #tpu.memory_space<vmem>>, vector<1x1x4x1xf32>
    %67 = vector.shape_cast %66 : vector<1x1x4x1xf32> to vector<4x1xf32>
    %c3_106 = arith.constant 3 : index
    %c1_107 = arith.constant 1 : index
    %c0_108 = arith.constant 0 : index
    %c0_109 = arith.constant 0 : index
    %68 = vector.load %arg4[%c3_106, %c1_107, %c0_108, %c0_109] : memref<10x6x4x1xf32, #tpu.memory_space<vmem>>, vector<1x1x4x1xf32>
    %69 = vector.shape_cast %68 : vector<1x1x4x1xf32> to vector<4x1xf32>
    %c3_110 = arith.constant 3 : index
    %c2_111 = arith.constant 2 : index
    %c0_112 = arith.constant 0 : index
    %c0_113 = arith.constant 0 : index
    %70 = vector.load %arg4[%c3_110, %c2_111, %c0_112, %c0_113] : memref<10x6x4x1xf32, #tpu.memory_space<vmem>>, vector<1x1x4x1xf32>
    %71 = vector.shape_cast %70 : vector<1x1x4x1xf32> to vector<4x1xf32>
    %c3_114 = arith.constant 3 : index
    %c3_115 = arith.constant 3 : index
    %c0_116 = arith.constant 0 : index
    %c0_117 = arith.constant 0 : index
    %72 = vector.load %arg4[%c3_114, %c3_115, %c0_116, %c0_117] : memref<10x6x4x1xf32, #tpu.memory_space<vmem>>, vector<1x1x4x1xf32>
    %73 = vector.shape_cast %72 : vector<1x1x4x1xf32> to vector<4x1xf32>
    %c3_118 = arith.constant 3 : index
    %c4_119 = arith.constant 4 : index
    %c0_120 = arith.constant 0 : index
    %c0_121 = arith.constant 0 : index
    %74 = vector.load %arg4[%c3_118, %c4_119, %c0_120, %c0_121] : memref<10x6x4x1xf32, #tpu.memory_space<vmem>>, vector<1x1x4x1xf32>
    %75 = vector.shape_cast %74 : vector<1x1x4x1xf32> to vector<4x1xf32>
    %c3_122 = arith.constant 3 : index
    %c5_123 = arith.constant 5 : index
    %c0_124 = arith.constant 0 : index
    %c0_125 = arith.constant 0 : index
    %76 = vector.load %arg4[%c3_122, %c5_123, %c0_124, %c0_125] : memref<10x6x4x1xf32, #tpu.memory_space<vmem>>, vector<1x1x4x1xf32>
    %77 = vector.shape_cast %76 : vector<1x1x4x1xf32> to vector<4x1xf32>
    %c4_126 = arith.constant 4 : index
    %c0_127 = arith.constant 0 : index
    %c0_128 = arith.constant 0 : index
    %c0_129 = arith.constant 0 : index
    %78 = vector.load %arg4[%c4_126, %c0_127, %c0_128, %c0_129] : memref<10x6x4x1xf32, #tpu.memory_space<vmem>>, vector<1x1x4x1xf32>
    %79 = vector.shape_cast %78 : vector<1x1x4x1xf32> to vector<4x1xf32>
    %c4_130 = arith.constant 4 : index
    %c1_131 = arith.constant 1 : index
    %c0_132 = arith.constant 0 : index
    %c0_133 = arith.constant 0 : index
    %80 = vector.load %arg4[%c4_130, %c1_131, %c0_132, %c0_133] : memref<10x6x4x1xf32, #tpu.memory_space<vmem>>, vector<1x1x4x1xf32>
    %81 = vector.shape_cast %80 : vector<1x1x4x1xf32> to vector<4x1xf32>
    %c4_134 = arith.constant 4 : index
    %c2_135 = arith.constant 2 : index
    %c0_136 = arith.constant 0 : index
    %c0_137 = arith.constant 0 : index
    %82 = vector.load %arg4[%c4_134, %c2_135, %c0_136, %c0_137] : memref<10x6x4x1xf32, #tpu.memory_space<vmem>>, vector<1x1x4x1xf32>
    %83 = vector.shape_cast %82 : vector<1x1x4x1xf32> to vector<4x1xf32>
    %c4_138 = arith.constant 4 : index
    %c3_139 = arith.constant 3 : index
    %c0_140 = arith.constant 0 : index
    %c0_141 = arith.constant 0 : index
    %84 = vector.load %arg4[%c4_138, %c3_139, %c0_140, %c0_141] : memref<10x6x4x1xf32, #tpu.memory_space<vmem>>, vector<1x1x4x1xf32>
    %85 = vector.shape_cast %84 : vector<1x1x4x1xf32> to vector<4x1xf32>
    %c4_142 = arith.constant 4 : index
    %c4_143 = arith.constant 4 : index
    %c0_144 = arith.constant 0 : index
    %c0_145 = arith.constant 0 : index
    %86 = vector.load %arg4[%c4_142, %c4_143, %c0_144, %c0_145] : memref<10x6x4x1xf32, #tpu.memory_space<vmem>>, vector<1x1x4x1xf32>
    %87 = vector.shape_cast %86 : vector<1x1x4x1xf32> to vector<4x1xf32>
    %c4_146 = arith.constant 4 : index
    %c5_147 = arith.constant 5 : index
    %c0_148 = arith.constant 0 : index
    %c0_149 = arith.constant 0 : index
    %88 = vector.load %arg4[%c4_146, %c5_147, %c0_148, %c0_149] : memref<10x6x4x1xf32, #tpu.memory_space<vmem>>, vector<1x1x4x1xf32>
    %89 = vector.shape_cast %88 : vector<1x1x4x1xf32> to vector<4x1xf32>
    %c5_150 = arith.constant 5 : index
    %c0_151 = arith.constant 0 : index
    %c0_152 = arith.constant 0 : index
    %c0_153 = arith.constant 0 : index
    %90 = vector.load %arg4[%c5_150, %c0_151, %c0_152, %c0_153] : memref<10x6x4x1xf32, #tpu.memory_space<vmem>>, vector<1x1x4x1xf32>
    %91 = vector.shape_cast %90 : vector<1x1x4x1xf32> to vector<4x1xf32>
    %c5_154 = arith.constant 5 : index
    %c1_155 = arith.constant 1 : index
    %c0_156 = arith.constant 0 : index
    %c0_157 = arith.constant 0 : index
    %92 = vector.load %arg4[%c5_154, %c1_155, %c0_156, %c0_157] : memref<10x6x4x1xf32, #tpu.memory_space<vmem>>, vector<1x1x4x1xf32>
    %93 = vector.shape_cast %92 : vector<1x1x4x1xf32> to vector<4x1xf32>
    %c5_158 = arith.constant 5 : index
    %c2_159 = arith.constant 2 : index
    %c0_160 = arith.constant 0 : index
    %c0_161 = arith.constant 0 : index
    %94 = vector.load %arg4[%c5_158, %c2_159, %c0_160, %c0_161] : memref<10x6x4x1xf32, #tpu.memory_space<vmem>>, vector<1x1x4x1xf32>
    %95 = vector.shape_cast %94 : vector<1x1x4x1xf32> to vector<4x1xf32>
    %c5_162 = arith.constant 5 : index
    %c3_163 = arith.constant 3 : index
    %c0_164 = arith.constant 0 : index
    %c0_165 = arith.constant 0 : index
    %96 = vector.load %arg4[%c5_162, %c3_163, %c0_164, %c0_165] : memref<10x6x4x1xf32, #tpu.memory_space<vmem>>, vector<1x1x4x1xf32>
    %97 = vector.shape_cast %96 : vector<1x1x4x1xf32> to vector<4x1xf32>
    %c5_166 = arith.constant 5 : index
    %c4_167 = arith.constant 4 : index
    %c0_168 = arith.constant 0 : index
    %c0_169 = arith.constant 0 : index
    %98 = vector.load %arg4[%c5_166, %c4_167, %c0_168, %c0_169] : memref<10x6x4x1xf32, #tpu.memory_space<vmem>>, vector<1x1x4x1xf32>
    %99 = vector.shape_cast %98 : vector<1x1x4x1xf32> to vector<4x1xf32>
    %c6 = arith.constant 6 : index
    %c0_170 = arith.constant 0 : index
    %c0_171 = arith.constant 0 : index
    %c0_172 = arith.constant 0 : index
    %100 = vector.load %arg4[%c6, %c0_170, %c0_171, %c0_172] : memref<10x6x4x1xf32, #tpu.memory_space<vmem>>, vector<1x1x4x1xf32>
    %101 = vector.shape_cast %100 : vector<1x1x4x1xf32> to vector<4x1xf32>
    %c6_173 = arith.constant 6 : index
    %c1_174 = arith.constant 1 : index
    %c0_175 = arith.constant 0 : index
    %c0_176 = arith.constant 0 : index
    %102 = vector.load %arg4[%c6_173, %c1_174, %c0_175, %c0_176] : memref<10x6x4x1xf32, #tpu.memory_space<vmem>>, vector<1x1x4x1xf32>
    %103 = vector.shape_cast %102 : vector<1x1x4x1xf32> to vector<4x1xf32>
    %c6_177 = arith.constant 6 : index
    %c2_178 = arith.constant 2 : index
    %c0_179 = arith.constant 0 : index
    %c0_180 = arith.constant 0 : index
    %104 = vector.load %arg4[%c6_177, %c2_178, %c0_179, %c0_180] : memref<10x6x4x1xf32, #tpu.memory_space<vmem>>, vector<1x1x4x1xf32>
    %105 = vector.shape_cast %104 : vector<1x1x4x1xf32> to vector<4x1xf32>
    %c6_181 = arith.constant 6 : index
    %c3_182 = arith.constant 3 : index
    %c0_183 = arith.constant 0 : index
    %c0_184 = arith.constant 0 : index
    %106 = vector.load %arg4[%c6_181, %c3_182, %c0_183, %c0_184] : memref<10x6x4x1xf32, #tpu.memory_space<vmem>>, vector<1x1x4x1xf32>
    %107 = vector.shape_cast %106 : vector<1x1x4x1xf32> to vector<4x1xf32>
    %c6_185 = arith.constant 6 : index
    %c4_186 = arith.constant 4 : index
    %c0_187 = arith.constant 0 : index
    %c0_188 = arith.constant 0 : index
    %108 = vector.load %arg4[%c6_185, %c4_186, %c0_187, %c0_188] : memref<10x6x4x1xf32, #tpu.memory_space<vmem>>, vector<1x1x4x1xf32>
    %109 = vector.shape_cast %108 : vector<1x1x4x1xf32> to vector<4x1xf32>
    %c6_189 = arith.constant 6 : index
    %c5_190 = arith.constant 5 : index
    %c0_191 = arith.constant 0 : index
    %c0_192 = arith.constant 0 : index
    %110 = vector.load %arg4[%c6_189, %c5_190, %c0_191, %c0_192] : memref<10x6x4x1xf32, #tpu.memory_space<vmem>>, vector<1x1x4x1xf32>
    %111 = vector.shape_cast %110 : vector<1x1x4x1xf32> to vector<4x1xf32>
    %c7 = arith.constant 7 : index
    %c0_193 = arith.constant 0 : index
    %c0_194 = arith.constant 0 : index
    %c0_195 = arith.constant 0 : index
    %112 = vector.load %arg4[%c7, %c0_193, %c0_194, %c0_195] : memref<10x6x4x1xf32, #tpu.memory_space<vmem>>, vector<1x1x4x1xf32>
    %113 = vector.shape_cast %112 : vector<1x1x4x1xf32> to vector<4x1xf32>
    %c7_196 = arith.constant 7 : index
    %c1_197 = arith.constant 1 : index
    %c0_198 = arith.constant 0 : index
    %c0_199 = arith.constant 0 : index
    %114 = vector.load %arg4[%c7_196, %c1_197, %c0_198, %c0_199] : memref<10x6x4x1xf32, #tpu.memory_space<vmem>>, vector<1x1x4x1xf32>
    %115 = vector.shape_cast %114 : vector<1x1x4x1xf32> to vector<4x1xf32>
    %c7_200 = arith.constant 7 : index
    %c2_201 = arith.constant 2 : index
    %c0_202 = arith.constant 0 : index
    %c0_203 = arith.constant 0 : index
    %116 = vector.load %arg4[%c7_200, %c2_201, %c0_202, %c0_203] : memref<10x6x4x1xf32, #tpu.memory_space<vmem>>, vector<1x1x4x1xf32>
    %117 = vector.shape_cast %116 : vector<1x1x4x1xf32> to vector<4x1xf32>
    %c7_204 = arith.constant 7 : index
    %c3_205 = arith.constant 3 : index
    %c0_206 = arith.constant 0 : index
    %c0_207 = arith.constant 0 : index
    %118 = vector.load %arg4[%c7_204, %c3_205, %c0_206, %c0_207] : memref<10x6x4x1xf32, #tpu.memory_space<vmem>>, vector<1x1x4x1xf32>
    %119 = vector.shape_cast %118 : vector<1x1x4x1xf32> to vector<4x1xf32>
    %c7_208 = arith.constant 7 : index
    %c4_209 = arith.constant 4 : index
    %c0_210 = arith.constant 0 : index
    %c0_211 = arith.constant 0 : index
    %120 = vector.load %arg4[%c7_208, %c4_209, %c0_210, %c0_211] : memref<10x6x4x1xf32, #tpu.memory_space<vmem>>, vector<1x1x4x1xf32>
    %121 = vector.shape_cast %120 : vector<1x1x4x1xf32> to vector<4x1xf32>
    %c7_212 = arith.constant 7 : index
    %c5_213 = arith.constant 5 : index
    %c0_214 = arith.constant 0 : index
    %c0_215 = arith.constant 0 : index
    %122 = vector.load %arg4[%c7_212, %c5_213, %c0_214, %c0_215] : memref<10x6x4x1xf32, #tpu.memory_space<vmem>>, vector<1x1x4x1xf32>
    %123 = vector.shape_cast %122 : vector<1x1x4x1xf32> to vector<4x1xf32>
    %c8 = arith.constant 8 : index
    %c0_216 = arith.constant 0 : index
    %c0_217 = arith.constant 0 : index
    %c0_218 = arith.constant 0 : index
    %124 = vector.load %arg4[%c8, %c0_216, %c0_217, %c0_218] : memref<10x6x4x1xf32, #tpu.memory_space<vmem>>, vector<1x1x4x1xf32>
    %125 = vector.shape_cast %124 : vector<1x1x4x1xf32> to vector<4x1xf32>
    %c8_219 = arith.constant 8 : index
    %c1_220 = arith.constant 1 : index
    %c0_221 = arith.constant 0 : index
    %c0_222 = arith.constant 0 : index
    %126 = vector.load %arg4[%c8_219, %c1_220, %c0_221, %c0_222] : memref<10x6x4x1xf32, #tpu.memory_space<vmem>>, vector<1x1x4x1xf32>
    %127 = vector.shape_cast %126 : vector<1x1x4x1xf32> to vector<4x1xf32>
    %c8_223 = arith.constant 8 : index
    %c2_224 = arith.constant 2 : index
    %c0_225 = arith.constant 0 : index
    %c0_226 = arith.constant 0 : index
    %128 = vector.load %arg4[%c8_223, %c2_224, %c0_225, %c0_226] : memref<10x6x4x1xf32, #tpu.memory_space<vmem>>, vector<1x1x4x1xf32>
    %129 = vector.shape_cast %128 : vector<1x1x4x1xf32> to vector<4x1xf32>
    %c8_227 = arith.constant 8 : index
    %c3_228 = arith.constant 3 : index
    %c0_229 = arith.constant 0 : index
    %c0_230 = arith.constant 0 : index
    %130 = vector.load %arg4[%c8_227, %c3_228, %c0_229, %c0_230] : memref<10x6x4x1xf32, #tpu.memory_space<vmem>>, vector<1x1x4x1xf32>
    %131 = vector.shape_cast %130 : vector<1x1x4x1xf32> to vector<4x1xf32>
    %c8_231 = arith.constant 8 : index
    %c4_232 = arith.constant 4 : index
    %c0_233 = arith.constant 0 : index
    %c0_234 = arith.constant 0 : index
    %132 = vector.load %arg4[%c8_231, %c4_232, %c0_233, %c0_234] : memref<10x6x4x1xf32, #tpu.memory_space<vmem>>, vector<1x1x4x1xf32>
    %133 = vector.shape_cast %132 : vector<1x1x4x1xf32> to vector<4x1xf32>
    %c8_235 = arith.constant 8 : index
    %c5_236 = arith.constant 5 : index
    %c0_237 = arith.constant 0 : index
    %c0_238 = arith.constant 0 : index
    %134 = vector.load %arg4[%c8_235, %c5_236, %c0_237, %c0_238] : memref<10x6x4x1xf32, #tpu.memory_space<vmem>>, vector<1x1x4x1xf32>
    %135 = vector.shape_cast %134 : vector<1x1x4x1xf32> to vector<4x1xf32>
    %c9 = arith.constant 9 : index
    %c0_239 = arith.constant 0 : index
    %c0_240 = arith.constant 0 : index
    %c0_241 = arith.constant 0 : index
    %136 = vector.load %arg4[%c9, %c0_239, %c0_240, %c0_241] : memref<10x6x4x1xf32, #tpu.memory_space<vmem>>, vector<1x1x4x1xf32>
    %137 = vector.shape_cast %136 : vector<1x1x4x1xf32> to vector<4x1xf32>
    %c9_242 = arith.constant 9 : index
    %c1_243 = arith.constant 1 : index
    %c0_244 = arith.constant 0 : index
    %c0_245 = arith.constant 0 : index
    %138 = vector.load %arg4[%c9_242, %c1_243, %c0_244, %c0_245] : memref<10x6x4x1xf32, #tpu.memory_space<vmem>>, vector<1x1x4x1xf32>
    %139 = vector.shape_cast %138 : vector<1x1x4x1xf32> to vector<4x1xf32>
    %c9_246 = arith.constant 9 : index
    %c2_247 = arith.constant 2 : index
    %c0_248 = arith.constant 0 : index
    %c0_249 = arith.constant 0 : index
    %140 = vector.load %arg4[%c9_246, %c2_247, %c0_248, %c0_249] : memref<10x6x4x1xf32, #tpu.memory_space<vmem>>, vector<1x1x4x1xf32>
    %141 = vector.shape_cast %140 : vector<1x1x4x1xf32> to vector<4x1xf32>
    %c9_250 = arith.constant 9 : index
    %c3_251 = arith.constant 3 : index
    %c0_252 = arith.constant 0 : index
    %c0_253 = arith.constant 0 : index
    %142 = vector.load %arg4[%c9_250, %c3_251, %c0_252, %c0_253] : memref<10x6x4x1xf32, #tpu.memory_space<vmem>>, vector<1x1x4x1xf32>
    %143 = vector.shape_cast %142 : vector<1x1x4x1xf32> to vector<4x1xf32>
    %c9_254 = arith.constant 9 : index
    %c4_255 = arith.constant 4 : index
    %c0_256 = arith.constant 0 : index
    %c0_257 = arith.constant 0 : index
    %144 = vector.load %arg4[%c9_254, %c4_255, %c0_256, %c0_257] : memref<10x6x4x1xf32, #tpu.memory_space<vmem>>, vector<1x1x4x1xf32>
    %145 = vector.shape_cast %144 : vector<1x1x4x1xf32> to vector<4x1xf32>
    %c9_258 = arith.constant 9 : index
    %c5_259 = arith.constant 5 : index
    %c0_260 = arith.constant 0 : index
    %c0_261 = arith.constant 0 : index
    %146 = vector.load %arg4[%c9_258, %c5_259, %c0_260, %c0_261] : memref<10x6x4x1xf32, #tpu.memory_space<vmem>>, vector<1x1x4x1xf32>
    %147 = vector.shape_cast %146 : vector<1x1x4x1xf32> to vector<4x1xf32>
    %c0_262 = arith.constant 0 : index
    %c0_263 = arith.constant 0 : index
    %c0_264 = arith.constant 0 : index
    %148 = vector.load %arg5[%c0_262, %c0_263, %c0_264] : memref<8x4x1xf32, #tpu.memory_space<vmem>>, vector<1x4x1xf32>
    %149 = vector.shape_cast %148 : vector<1x4x1xf32> to vector<4x1xf32>
    %c1_265 = arith.constant 1 : index
    %c0_266 = arith.constant 0 : index
    %c0_267 = arith.constant 0 : index
    %150 = vector.load %arg5[%c1_265, %c0_266, %c0_267] : memref<8x4x1xf32, #tpu.memory_space<vmem>>, vector<1x4x1xf32>
    %151 = vector.shape_cast %150 : vector<1x4x1xf32> to vector<4x1xf32>
    %c2_268 = arith.constant 2 : index
    %c0_269 = arith.constant 0 : index
    %c0_270 = arith.constant 0 : index
    %152 = vector.load %arg5[%c2_268, %c0_269, %c0_270] : memref<8x4x1xf32, #tpu.memory_space<vmem>>, vector<1x4x1xf32>
    %153 = vector.shape_cast %152 : vector<1x4x1xf32> to vector<4x1xf32>
    %c3_271 = arith.constant 3 : index
    %c0_272 = arith.constant 0 : index
    %c0_273 = arith.constant 0 : index
    %154 = vector.load %arg5[%c3_271, %c0_272, %c0_273] : memref<8x4x1xf32, #tpu.memory_space<vmem>>, vector<1x4x1xf32>
    %155 = vector.shape_cast %154 : vector<1x4x1xf32> to vector<4x1xf32>
    %c4_274 = arith.constant 4 : index
    %c0_275 = arith.constant 0 : index
    %c0_276 = arith.constant 0 : index
    %156 = vector.load %arg5[%c4_274, %c0_275, %c0_276] : memref<8x4x1xf32, #tpu.memory_space<vmem>>, vector<1x4x1xf32>
    %157 = vector.shape_cast %156 : vector<1x4x1xf32> to vector<4x1xf32>
    %c5_277 = arith.constant 5 : index
    %c0_278 = arith.constant 0 : index
    %c0_279 = arith.constant 0 : index
    %158 = vector.load %arg5[%c5_277, %c0_278, %c0_279] : memref<8x4x1xf32, #tpu.memory_space<vmem>>, vector<1x4x1xf32>
    %159 = vector.shape_cast %158 : vector<1x4x1xf32> to vector<4x1xf32>
    %c6_280 = arith.constant 6 : index
    %c0_281 = arith.constant 0 : index
    %c0_282 = arith.constant 0 : index
    %160 = vector.load %arg5[%c6_280, %c0_281, %c0_282] : memref<8x4x1xf32, #tpu.memory_space<vmem>>, vector<1x4x1xf32>
    %161 = vector.shape_cast %160 : vector<1x4x1xf32> to vector<4x1xf32>
    %c7_283 = arith.constant 7 : index
    %c0_284 = arith.constant 0 : index
    %c0_285 = arith.constant 0 : index
    %162 = vector.load %arg5[%c7_283, %c0_284, %c0_285] : memref<8x4x1xf32, #tpu.memory_space<vmem>>, vector<1x4x1xf32>
    %163 = vector.shape_cast %162 : vector<1x4x1xf32> to vector<4x1xf32>
    %164 = vector.broadcast %31 : vector<4x1xf32> to vector<4x128xf32>
    %165 = arith.mulf %164, %24 : vector<4x128xf32>
    %166 = vector.broadcast %33 : vector<4x1xf32> to vector<4x128xf32>
    %167 = arith.mulf %166, %25 : vector<4x128xf32>
    %168 = arith.addf %165, %167 : vector<4x128xf32>
    %169 = vector.broadcast %35 : vector<4x1xf32> to vector<4x128xf32>
    %170 = arith.mulf %169, %26 : vector<4x128xf32>
    %171 = arith.addf %168, %170 : vector<4x128xf32>
    %172 = vector.broadcast %37 : vector<4x1xf32> to vector<4x128xf32>
    %173 = arith.mulf %172, %27 : vector<4x128xf32>
    %174 = arith.addf %171, %173 : vector<4x128xf32>
    %175 = vector.broadcast %39 : vector<4x1xf32> to vector<4x128xf32>
    %176 = arith.mulf %175, %28 : vector<4x128xf32>
    %177 = arith.addf %174, %176 : vector<4x128xf32>
    %178 = vector.broadcast %41 : vector<4x1xf32> to vector<4x128xf32>
    %179 = arith.mulf %178, %29 : vector<4x128xf32>
    %180 = arith.addf %177, %179 : vector<4x128xf32>
    %181 = vector.broadcast %149 : vector<4x1xf32> to vector<4x128xf32>
    %182 = arith.mulf %180, %181 : vector<4x128xf32>
    %183 = arith.addf %24, %25 : vector<4x128xf32>
    %184 = arith.addf %183, %26 : vector<4x128xf32>
    %185 = arith.addf %184, %27 : vector<4x128xf32>
    %186 = arith.addf %185, %28 : vector<4x128xf32>
    %187 = arith.addf %186, %29 : vector<4x128xf32>
    %cst = arith.constant 0.166666672 : f32
    %188 = vector.broadcast %cst : f32 to vector<4x128xf32>
    %189 = arith.mulf %187, %188 : vector<4x128xf32>
    %190 = vector.broadcast %43 : vector<4x1xf32> to vector<4x128xf32>
    %191 = arith.mulf %13, %190 : vector<4x128xf32>
    %192 = vector.broadcast %45 : vector<4x1xf32> to vector<4x128xf32>
    %193 = arith.mulf %15, %192 : vector<4x128xf32>
    %194 = vector.broadcast %47 : vector<4x1xf32> to vector<4x128xf32>
    %195 = arith.mulf %17, %194 : vector<4x128xf32>
    %196 = vector.broadcast %49 : vector<4x1xf32> to vector<4x128xf32>
    %197 = arith.mulf %19, %196 : vector<4x128xf32>
    %198 = vector.broadcast %51 : vector<4x1xf32> to vector<4x128xf32>
    %199 = arith.mulf %21, %198 : vector<4x128xf32>
    %200 = vector.broadcast %53 : vector<4x1xf32> to vector<4x128xf32>
    %201 = arith.mulf %23, %200 : vector<4x128xf32>
    %202 = arith.subf %1, %189 : vector<4x128xf32>
    %203 = arith.mulf %202, %202 : vector<4x128xf32>
    %204 = arith.mulf %191, %203 : vector<4x128xf32>
    %205 = arith.subf %3, %189 : vector<4x128xf32>
    %206 = arith.mulf %205, %205 : vector<4x128xf32>
    %207 = arith.mulf %193, %206 : vector<4x128xf32>
    %208 = arith.addf %204, %207 : vector<4x128xf32>
    %209 = arith.subf %5, %189 : vector<4x128xf32>
    %210 = arith.mulf %209, %209 : vector<4x128xf32>
    %211 = arith.mulf %195, %210 : vector<4x128xf32>
    %212 = arith.addf %208, %211 : vector<4x128xf32>
    %213 = arith.subf %7, %189 : vector<4x128xf32>
    %214 = arith.mulf %213, %213 : vector<4x128xf32>
    %215 = arith.mulf %197, %214 : vector<4x128xf32>
    %216 = arith.addf %212, %215 : vector<4x128xf32>
    %217 = arith.subf %9, %189 : vector<4x128xf32>
    %218 = arith.mulf %217, %217 : vector<4x128xf32>
    %219 = arith.mulf %199, %218 : vector<4x128xf32>
    %220 = arith.addf %216, %219 : vector<4x128xf32>
    %221 = arith.subf %11, %189 : vector<4x128xf32>
    %222 = arith.mulf %221, %221 : vector<4x128xf32>
    %223 = arith.mulf %201, %222 : vector<4x128xf32>
    %224 = arith.addf %220, %223 : vector<4x128xf32>
    %225 = arith.addf %191, %193 : vector<4x128xf32>
    %226 = arith.addf %225, %195 : vector<4x128xf32>
    %227 = arith.addf %226, %197 : vector<4x128xf32>
    %228 = arith.addf %227, %199 : vector<4x128xf32>
    %229 = arith.addf %228, %201 : vector<4x128xf32>
    %230 = vector.broadcast %137 : vector<4x1xf32> to vector<4x128xf32>
    %231 = arith.mulf %13, %230 : vector<4x128xf32>
    %232 = vector.broadcast %139 : vector<4x1xf32> to vector<4x128xf32>
    %233 = arith.mulf %15, %232 : vector<4x128xf32>
    %234 = arith.addf %231, %233 : vector<4x128xf32>
    %235 = vector.broadcast %141 : vector<4x1xf32> to vector<4x128xf32>
    %236 = arith.mulf %17, %235 : vector<4x128xf32>
    %237 = arith.addf %234, %236 : vector<4x128xf32>
    %238 = vector.broadcast %143 : vector<4x1xf32> to vector<4x128xf32>
    %239 = arith.mulf %19, %238 : vector<4x128xf32>
    %240 = arith.addf %237, %239 : vector<4x128xf32>
    %241 = vector.broadcast %145 : vector<4x1xf32> to vector<4x128xf32>
    %242 = arith.mulf %21, %241 : vector<4x128xf32>
    %243 = arith.addf %240, %242 : vector<4x128xf32>
    %244 = vector.broadcast %147 : vector<4x1xf32> to vector<4x128xf32>
    %245 = arith.mulf %23, %244 : vector<4x128xf32>
    %246 = arith.addf %243, %245 : vector<4x128xf32>
    %247 = arith.mulf %229, %229 : vector<4x128xf32>
    %248 = arith.addf %247, %246 : vector<4x128xf32>
    %cst_286 = arith.constant 0.00999999977 : f32
    %249 = vector.broadcast %cst_286 : f32 to vector<4x128xf32>
    %250 = arith.addf %248, %249 : vector<4x128xf32>
    %251 = tpu.reciprocal %250 : vector<4x128xf32> -> vector<4x128xf32>
    %252 = arith.mulf %247, %251 : vector<4x128xf32>
    %cst_287 = arith.constant 0.00999999977 : f32
    %253 = vector.broadcast %cst_287 : f32 to vector<4x128xf32>
    %254 = arith.addf %252, %253 : vector<4x128xf32>
    %255 = tpu.reciprocal %254 : vector<4x128xf32> -> vector<4x128xf32>
    %256 = arith.mulf %224, %255 : vector<4x128xf32>
    %257 = vector.broadcast %55 : vector<4x1xf32> to vector<4x128xf32>
    %258 = arith.mulf %257, %13 : vector<4x128xf32>
    %259 = vector.broadcast %57 : vector<4x1xf32> to vector<4x128xf32>
    %260 = arith.mulf %259, %15 : vector<4x128xf32>
    %261 = arith.addf %258, %260 : vector<4x128xf32>
    %262 = vector.broadcast %59 : vector<4x1xf32> to vector<4x128xf32>
    %263 = arith.mulf %262, %17 : vector<4x128xf32>
    %264 = arith.addf %261, %263 : vector<4x128xf32>
    %265 = vector.broadcast %61 : vector<4x1xf32> to vector<4x128xf32>
    %266 = arith.mulf %265, %19 : vector<4x128xf32>
    %267 = arith.addf %264, %266 : vector<4x128xf32>
    %268 = vector.broadcast %63 : vector<4x1xf32> to vector<4x128xf32>
    %269 = arith.mulf %268, %21 : vector<4x128xf32>
    %270 = arith.addf %267, %269 : vector<4x128xf32>
    %271 = vector.broadcast %65 : vector<4x1xf32> to vector<4x128xf32>
    %272 = arith.mulf %271, %23 : vector<4x128xf32>
    %273 = arith.addf %270, %272 : vector<4x128xf32>
    %274 = vector.broadcast %151 : vector<4x1xf32> to vector<4x128xf32>
    %275 = arith.mulf %273, %274 : vector<4x128xf32>
    %276 = arith.negf %275 : vector<4x128xf32>
    %277 = math.exp %276 : vector<4x128xf32>
    %cst_288 = arith.constant 1.000000e+00 : f32
    %278 = vector.broadcast %cst_288 : f32 to vector<4x128xf32>
    %279 = arith.addf %278, %277 : vector<4x128xf32>
    %280 = arith.divf %278, %279 : vector<4x128xf32>
    %cst_289 = arith.constant 5.000000e-01 : f32
    %281 = vector.broadcast %cst_289 : f32 to vector<4x128xf32>
    %282 = arith.subf %280, %281 : vector<4x128xf32>
    %283 = vector.broadcast %67 : vector<4x1xf32> to vector<4x128xf32>
    %284 = arith.mulf %283, %13 : vector<4x128xf32>
    %285 = vector.broadcast %69 : vector<4x1xf32> to vector<4x128xf32>
    %286 = arith.mulf %285, %15 : vector<4x128xf32>
    %287 = arith.addf %284, %286 : vector<4x128xf32>
    %288 = vector.broadcast %71 : vector<4x1xf32> to vector<4x128xf32>
    %289 = arith.mulf %288, %17 : vector<4x128xf32>
    %290 = arith.addf %287, %289 : vector<4x128xf32>
    %291 = vector.broadcast %73 : vector<4x1xf32> to vector<4x128xf32>
    %292 = arith.mulf %291, %19 : vector<4x128xf32>
    %293 = arith.addf %290, %292 : vector<4x128xf32>
    %294 = vector.broadcast %75 : vector<4x1xf32> to vector<4x128xf32>
    %295 = arith.mulf %294, %21 : vector<4x128xf32>
    %296 = arith.addf %293, %295 : vector<4x128xf32>
    %297 = vector.broadcast %77 : vector<4x1xf32> to vector<4x128xf32>
    %298 = arith.mulf %297, %23 : vector<4x128xf32>
    %299 = arith.addf %296, %298 : vector<4x128xf32>
    %300 = vector.broadcast %153 : vector<4x1xf32> to vector<4x128xf32>
    %301 = arith.mulf %299, %300 : vector<4x128xf32>
    %302 = arith.addf %13, %15 : vector<4x128xf32>
    %303 = arith.addf %302, %17 : vector<4x128xf32>
    %304 = arith.addf %303, %19 : vector<4x128xf32>
    %305 = arith.addf %304, %21 : vector<4x128xf32>
    %306 = arith.addf %305, %23 : vector<4x128xf32>
    %cst_290 = arith.constant 0.166666672 : f32
    %307 = vector.broadcast %cst_290 : f32 to vector<4x128xf32>
    %308 = arith.mulf %306, %307 : vector<4x128xf32>
    %309 = arith.subf %13, %308 : vector<4x128xf32>
    %310 = arith.mulf %309, %309 : vector<4x128xf32>
    %311 = vector.broadcast %79 : vector<4x1xf32> to vector<4x128xf32>
    %312 = arith.mulf %311, %310 : vector<4x128xf32>
    %313 = arith.subf %15, %308 : vector<4x128xf32>
    %314 = arith.mulf %313, %313 : vector<4x128xf32>
    %315 = vector.broadcast %81 : vector<4x1xf32> to vector<4x128xf32>
    %316 = arith.mulf %315, %314 : vector<4x128xf32>
    %317 = arith.addf %312, %316 : vector<4x128xf32>
    %318 = arith.subf %17, %308 : vector<4x128xf32>
    %319 = arith.mulf %318, %318 : vector<4x128xf32>
    %320 = vector.broadcast %83 : vector<4x1xf32> to vector<4x128xf32>
    %321 = arith.mulf %320, %319 : vector<4x128xf32>
    %322 = arith.addf %317, %321 : vector<4x128xf32>
    %323 = arith.subf %19, %308 : vector<4x128xf32>
    %324 = arith.mulf %323, %323 : vector<4x128xf32>
    %325 = vector.broadcast %85 : vector<4x1xf32> to vector<4x128xf32>
    %326 = arith.mulf %325, %324 : vector<4x128xf32>
    %327 = arith.addf %322, %326 : vector<4x128xf32>
    %328 = arith.subf %21, %308 : vector<4x128xf32>
    %329 = arith.mulf %328, %328 : vector<4x128xf32>
    %330 = vector.broadcast %87 : vector<4x1xf32> to vector<4x128xf32>
    %331 = arith.mulf %330, %329 : vector<4x128xf32>
    %332 = arith.addf %327, %331 : vector<4x128xf32>
    %333 = arith.subf %23, %308 : vector<4x128xf32>
    %334 = arith.mulf %333, %333 : vector<4x128xf32>
    %335 = vector.broadcast %89 : vector<4x1xf32> to vector<4x128xf32>
    %336 = arith.mulf %335, %334 : vector<4x128xf32>
    %337 = arith.addf %332, %336 : vector<4x128xf32>
    %338 = vector.broadcast %155 : vector<4x1xf32> to vector<4x128xf32>
    %339 = arith.mulf %337, %338 : vector<4x128xf32>
    %340 = arith.subf %3, %1 : vector<4x128xf32>
    %341 = math.absf %340 : vector<4x128xf32>
    %342 = vector.broadcast %91 : vector<4x1xf32> to vector<4x128xf32>
    %343 = arith.mulf %342, %341 : vector<4x128xf32>
    %344 = arith.subf %5, %3 : vector<4x128xf32>
    %345 = math.absf %344 : vector<4x128xf32>
    %346 = vector.broadcast %93 : vector<4x1xf32> to vector<4x128xf32>
    %347 = arith.mulf %346, %345 : vector<4x128xf32>
    %348 = arith.addf %343, %347 : vector<4x128xf32>
    %349 = arith.subf %7, %5 : vector<4x128xf32>
    %350 = math.absf %349 : vector<4x128xf32>
    %351 = vector.broadcast %95 : vector<4x1xf32> to vector<4x128xf32>
    %352 = arith.mulf %351, %350 : vector<4x128xf32>
    %353 = arith.addf %348, %352 : vector<4x128xf32>
    %354 = arith.subf %9, %7 : vector<4x128xf32>
    %355 = math.absf %354 : vector<4x128xf32>
    %356 = vector.broadcast %97 : vector<4x1xf32> to vector<4x128xf32>
    %357 = arith.mulf %356, %355 : vector<4x128xf32>
    %358 = arith.addf %353, %357 : vector<4x128xf32>
    %359 = arith.subf %11, %9 : vector<4x128xf32>
    %360 = math.absf %359 : vector<4x128xf32>
    %361 = vector.broadcast %99 : vector<4x1xf32> to vector<4x128xf32>
    %362 = arith.mulf %361, %360 : vector<4x128xf32>
    %363 = arith.addf %358, %362 : vector<4x128xf32>
    %364 = vector.broadcast %157 : vector<4x1xf32> to vector<4x128xf32>
    %365 = arith.mulf %363, %364 : vector<4x128xf32>
    %cst_291 = arith.constant 5.000000e+00 : f32
    %366 = vector.broadcast %cst_291 : f32 to vector<4x128xf32>
    %367 = arith.cmpf oge, %21, %23 : vector<4x128xf32>
    %cst_292 = arith.constant 4.000000e+00 : f32
    %368 = vector.broadcast %cst_292 : f32 to vector<4x128xf32>
    %369 = arith.select %367, %368, %366 : vector<4x128xi1>, vector<4x128xf32>
    %370 = arith.maximumf %21, %23 : vector<4x128xf32>
    %371 = arith.cmpf oge, %19, %370 : vector<4x128xf32>
    %cst_293 = arith.constant 3.000000e+00 : f32
    %372 = vector.broadcast %cst_293 : f32 to vector<4x128xf32>
    %373 = arith.select %371, %372, %369 : vector<4x128xi1>, vector<4x128xf32>
    %374 = arith.maximumf %19, %370 : vector<4x128xf32>
    %375 = arith.cmpf oge, %17, %374 : vector<4x128xf32>
    %cst_294 = arith.constant 2.000000e+00 : f32
    %376 = vector.broadcast %cst_294 : f32 to vector<4x128xf32>
    %377 = arith.select %375, %376, %373 : vector<4x128xi1>, vector<4x128xf32>
    %378 = arith.maximumf %17, %374 : vector<4x128xf32>
    %379 = arith.cmpf oge, %15, %378 : vector<4x128xf32>
    %cst_295 = arith.constant 1.000000e+00 : f32
    %380 = vector.broadcast %cst_295 : f32 to vector<4x128xf32>
    %381 = arith.select %379, %380, %377 : vector<4x128xi1>, vector<4x128xf32>
    %382 = arith.maximumf %15, %378 : vector<4x128xf32>
    %383 = arith.cmpf oge, %13, %382 : vector<4x128xf32>
    %cst_296 = arith.constant 0.000000e+00 : f32
    %384 = vector.broadcast %cst_296 : f32 to vector<4x128xf32>
    %385 = arith.select %383, %384, %381 : vector<4x128xi1>, vector<4x128xf32>
    %386 = arith.maximumf %13, %382 : vector<4x128xf32>
    %cst_297 = arith.constant 0.000000e+00 : f32
    %387 = vector.broadcast %cst_297 : f32 to vector<4x128xf32>
    %388 = arith.cmpf oeq, %386, %387 : vector<4x128xf32>
    %cst_298 = arith.constant -1.000000e+00 : f32
    %389 = vector.broadcast %cst_298 : f32 to vector<4x128xf32>
    %390 = arith.select %388, %389, %385 : vector<4x128xi1>, vector<4x128xf32>
    %cst_299 = arith.constant 0.166666672 : f32
    %391 = vector.broadcast %cst_299 : f32 to vector<4x128xf32>
    %392 = arith.mulf %390, %391 : vector<4x128xf32>
    %cst_300 = arith.constant 0.000000e+00 : f32
    %393 = vector.broadcast %cst_300 : f32 to vector<4x128xf32>
    %394 = arith.cmpf oge, %15, %13 : vector<4x128xf32>
    %cst_301 = arith.constant 1.000000e+00 : f32
    %395 = vector.broadcast %cst_301 : f32 to vector<4x128xf32>
    %396 = arith.select %394, %395, %393 : vector<4x128xi1>, vector<4x128xf32>
    %397 = arith.maximumf %15, %13 : vector<4x128xf32>
    %398 = arith.cmpf oge, %17, %397 : vector<4x128xf32>
    %cst_302 = arith.constant 2.000000e+00 : f32
    %399 = vector.broadcast %cst_302 : f32 to vector<4x128xf32>
    %400 = arith.select %398, %399, %396 : vector<4x128xi1>, vector<4x128xf32>
    %401 = arith.maximumf %17, %397 : vector<4x128xf32>
    %402 = arith.cmpf oge, %19, %401 : vector<4x128xf32>
    %cst_303 = arith.constant 3.000000e+00 : f32
    %403 = vector.broadcast %cst_303 : f32 to vector<4x128xf32>
    %404 = arith.select %402, %403, %400 : vector<4x128xi1>, vector<4x128xf32>
    %405 = arith.maximumf %19, %401 : vector<4x128xf32>
    %406 = arith.cmpf oge, %21, %405 : vector<4x128xf32>
    %cst_304 = arith.constant 4.000000e+00 : f32
    %407 = vector.broadcast %cst_304 : f32 to vector<4x128xf32>
    %408 = arith.select %406, %407, %404 : vector<4x128xi1>, vector<4x128xf32>
    %409 = arith.maximumf %21, %405 : vector<4x128xf32>
    %410 = arith.cmpf oge, %23, %409 : vector<4x128xf32>
    %cst_305 = arith.constant 5.000000e+00 : f32
    %411 = vector.broadcast %cst_305 : f32 to vector<4x128xf32>
    %412 = arith.select %410, %411, %408 : vector<4x128xi1>, vector<4x128xf32>
    %413 = arith.maximumf %23, %409 : vector<4x128xf32>
    %cst_306 = arith.constant 0.000000e+00 : f32
    %414 = vector.broadcast %cst_306 : f32 to vector<4x128xf32>
    %415 = arith.cmpf oeq, %413, %414 : vector<4x128xf32>
    %cst_307 = arith.constant 5.000000e+00 : f32
    %416 = vector.broadcast %cst_307 : f32 to vector<4x128xf32>
    %417 = arith.subf %416, %412 : vector<4x128xf32>
    %cst_308 = arith.constant 6.000000e+00 : f32
    %418 = vector.broadcast %cst_308 : f32 to vector<4x128xf32>
    %419 = arith.select %415, %418, %417 : vector<4x128xi1>, vector<4x128xf32>
    %cst_309 = arith.constant 6.000000e+00 : f32
    %420 = vector.broadcast %cst_309 : f32 to vector<4x128xf32>
    %421 = arith.subf %420, %419 : vector<4x128xf32>
    %cst_310 = arith.constant 0.166666672 : f32
    %422 = vector.broadcast %cst_310 : f32 to vector<4x128xf32>
    %423 = arith.mulf %421, %422 : vector<4x128xf32>
    %cst_311 = arith.constant 0.000000e+00 : f32
    %424 = vector.broadcast %cst_311 : f32 to vector<4x128xf32>
    %425 = arith.mulf %13, %424 : vector<4x128xf32>
    %cst_312 = arith.constant 1.000000e+00 : f32
    %426 = vector.broadcast %cst_312 : f32 to vector<4x128xf32>
    %427 = arith.mulf %15, %426 : vector<4x128xf32>
    %cst_313 = arith.constant 2.000000e+00 : f32
    %428 = vector.broadcast %cst_313 : f32 to vector<4x128xf32>
    %429 = arith.mulf %17, %428 : vector<4x128xf32>
    %cst_314 = arith.constant 3.000000e+00 : f32
    %430 = vector.broadcast %cst_314 : f32 to vector<4x128xf32>
    %431 = arith.mulf %19, %430 : vector<4x128xf32>
    %cst_315 = arith.constant 4.000000e+00 : f32
    %432 = vector.broadcast %cst_315 : f32 to vector<4x128xf32>
    %433 = arith.mulf %21, %432 : vector<4x128xf32>
    %cst_316 = arith.constant 5.000000e+00 : f32
    %434 = vector.broadcast %cst_316 : f32 to vector<4x128xf32>
    %435 = arith.mulf %23, %434 : vector<4x128xf32>
    %436 = vector.broadcast %101 : vector<4x1xf32> to vector<4x128xf32>
    %437 = arith.mulf %436, %425 : vector<4x128xf32>
    %438 = vector.broadcast %103 : vector<4x1xf32> to vector<4x128xf32>
    %439 = arith.mulf %438, %427 : vector<4x128xf32>
    %440 = arith.addf %437, %439 : vector<4x128xf32>
    %441 = vector.broadcast %105 : vector<4x1xf32> to vector<4x128xf32>
    %442 = arith.mulf %441, %429 : vector<4x128xf32>
    %443 = arith.addf %440, %442 : vector<4x128xf32>
    %444 = vector.broadcast %107 : vector<4x1xf32> to vector<4x128xf32>
    %445 = arith.mulf %444, %431 : vector<4x128xf32>
    %446 = arith.addf %443, %445 : vector<4x128xf32>
    %447 = vector.broadcast %109 : vector<4x1xf32> to vector<4x128xf32>
    %448 = arith.mulf %447, %433 : vector<4x128xf32>
    %449 = arith.addf %446, %448 : vector<4x128xf32>
    %450 = vector.broadcast %111 : vector<4x1xf32> to vector<4x128xf32>
    %451 = arith.mulf %450, %435 : vector<4x128xf32>
    %452 = arith.addf %449, %451 : vector<4x128xf32>
    %453 = vector.broadcast %159 : vector<4x1xf32> to vector<4x128xf32>
    %454 = arith.mulf %452, %453 : vector<4x128xf32>
    %455 = vector.broadcast %101 : vector<4x1xf32> to vector<4x128xf32>
    %456 = arith.mulf %455, %24 : vector<4x128xf32>
    %457 = vector.broadcast %103 : vector<4x1xf32> to vector<4x128xf32>
    %458 = arith.mulf %457, %25 : vector<4x128xf32>
    %459 = arith.addf %456, %458 : vector<4x128xf32>
    %460 = vector.broadcast %105 : vector<4x1xf32> to vector<4x128xf32>
    %461 = arith.mulf %460, %26 : vector<4x128xf32>
    %462 = arith.addf %459, %461 : vector<4x128xf32>
    %463 = vector.broadcast %107 : vector<4x1xf32> to vector<4x128xf32>
    %464 = arith.mulf %463, %27 : vector<4x128xf32>
    %465 = arith.addf %462, %464 : vector<4x128xf32>
    %466 = vector.broadcast %109 : vector<4x1xf32> to vector<4x128xf32>
    %467 = arith.mulf %466, %28 : vector<4x128xf32>
    %468 = arith.addf %465, %467 : vector<4x128xf32>
    %469 = vector.broadcast %111 : vector<4x1xf32> to vector<4x128xf32>
    %470 = arith.mulf %469, %29 : vector<4x128xf32>
    %471 = arith.addf %468, %470 : vector<4x128xf32>
    %472 = vector.broadcast %159 : vector<4x1xf32> to vector<4x128xf32>
    %473 = arith.mulf %471, %472 : vector<4x128xf32>
    %474 = arith.subf %425, %454 : vector<4x128xf32>
    %475 = vector.broadcast %101 : vector<4x1xf32> to vector<4x128xf32>
    %476 = arith.mulf %475, %474 : vector<4x128xf32>
    %477 = arith.subf %24, %473 : vector<4x128xf32>
    %478 = arith.mulf %476, %477 : vector<4x128xf32>
    %479 = arith.subf %427, %454 : vector<4x128xf32>
    %480 = vector.broadcast %103 : vector<4x1xf32> to vector<4x128xf32>
    %481 = arith.mulf %480, %479 : vector<4x128xf32>
    %482 = arith.subf %25, %473 : vector<4x128xf32>
    %483 = arith.mulf %481, %482 : vector<4x128xf32>
    %484 = arith.addf %478, %483 : vector<4x128xf32>
    %485 = arith.subf %429, %454 : vector<4x128xf32>
    %486 = vector.broadcast %105 : vector<4x1xf32> to vector<4x128xf32>
    %487 = arith.mulf %486, %485 : vector<4x128xf32>
    %488 = arith.subf %26, %473 : vector<4x128xf32>
    %489 = arith.mulf %487, %488 : vector<4x128xf32>
    %490 = arith.addf %484, %489 : vector<4x128xf32>
    %491 = arith.subf %431, %454 : vector<4x128xf32>
    %492 = vector.broadcast %107 : vector<4x1xf32> to vector<4x128xf32>
    %493 = arith.mulf %492, %491 : vector<4x128xf32>
    %494 = arith.subf %27, %473 : vector<4x128xf32>
    %495 = arith.mulf %493, %494 : vector<4x128xf32>
    %496 = arith.addf %490, %495 : vector<4x128xf32>
    %497 = arith.subf %433, %454 : vector<4x128xf32>
    %498 = vector.broadcast %109 : vector<4x1xf32> to vector<4x128xf32>
    %499 = arith.mulf %498, %497 : vector<4x128xf32>
    %500 = arith.subf %28, %473 : vector<4x128xf32>
    %501 = arith.mulf %499, %500 : vector<4x128xf32>
    %502 = arith.addf %496, %501 : vector<4x128xf32>
    %503 = arith.subf %435, %454 : vector<4x128xf32>
    %504 = vector.broadcast %111 : vector<4x1xf32> to vector<4x128xf32>
    %505 = arith.mulf %504, %503 : vector<4x128xf32>
    %506 = arith.subf %29, %473 : vector<4x128xf32>
    %507 = arith.mulf %505, %506 : vector<4x128xf32>
    %508 = arith.addf %502, %507 : vector<4x128xf32>
    %509 = arith.subf %425, %454 : vector<4x128xf32>
    %510 = arith.mulf %509, %509 : vector<4x128xf32>
    %511 = vector.broadcast %101 : vector<4x1xf32> to vector<4x128xf32>
    %512 = arith.mulf %511, %510 : vector<4x128xf32>
    %513 = arith.subf %427, %454 : vector<4x128xf32>
    %514 = arith.mulf %513, %513 : vector<4x128xf32>
    %515 = vector.broadcast %103 : vector<4x1xf32> to vector<4x128xf32>
    %516 = arith.mulf %515, %514 : vector<4x128xf32>
    %517 = arith.addf %512, %516 : vector<4x128xf32>
    %518 = arith.subf %429, %454 : vector<4x128xf32>
    %519 = arith.mulf %518, %518 : vector<4x128xf32>
    %520 = vector.broadcast %105 : vector<4x1xf32> to vector<4x128xf32>
    %521 = arith.mulf %520, %519 : vector<4x128xf32>
    %522 = arith.addf %517, %521 : vector<4x128xf32>
    %523 = arith.subf %431, %454 : vector<4x128xf32>
    %524 = arith.mulf %523, %523 : vector<4x128xf32>
    %525 = vector.broadcast %107 : vector<4x1xf32> to vector<4x128xf32>
    %526 = arith.mulf %525, %524 : vector<4x128xf32>
    %527 = arith.addf %522, %526 : vector<4x128xf32>
    %528 = arith.subf %433, %454 : vector<4x128xf32>
    %529 = arith.mulf %528, %528 : vector<4x128xf32>
    %530 = vector.broadcast %109 : vector<4x1xf32> to vector<4x128xf32>
    %531 = arith.mulf %530, %529 : vector<4x128xf32>
    %532 = arith.addf %527, %531 : vector<4x128xf32>
    %533 = arith.subf %435, %454 : vector<4x128xf32>
    %534 = arith.mulf %533, %533 : vector<4x128xf32>
    %535 = vector.broadcast %111 : vector<4x1xf32> to vector<4x128xf32>
    %536 = arith.mulf %535, %534 : vector<4x128xf32>
    %537 = arith.addf %532, %536 : vector<4x128xf32>
    %cst_317 = arith.constant 0.00999999977 : f32
    %538 = vector.broadcast %cst_317 : f32 to vector<4x128xf32>
    %539 = arith.addf %537, %538 : vector<4x128xf32>
    %540 = tpu.reciprocal %539 : vector<4x128xf32> -> vector<4x128xf32>
    %541 = arith.mulf %508, %540 : vector<4x128xf32>
    %cst_318 = arith.constant 0.000000e+00 : f32
    %542 = vector.broadcast %cst_318 : f32 to vector<4x128xf32>
    %543 = arith.cmpf ogt, %537, %542 : vector<4x128xf32>
    %544 = arith.select %543, %540, %537 : vector<4x128xi1>, vector<4x128xf32>
    %545 = vector.broadcast %113 : vector<4x1xf32> to vector<4x128xf32>
    %546 = arith.mulf %13, %545 : vector<4x128xf32>
    %cst_319 = arith.constant 1.000000e+01 : f32
    %547 = vector.broadcast %cst_319 : f32 to vector<4x128xf32>
    %548 = arith.mulf %1, %547 : vector<4x128xf32>
    %549 = vector.broadcast %161 : vector<4x1xf32> to vector<4x128xf32>
    %550 = arith.subf %548, %549 : vector<4x128xf32>
    %551 = arith.negf %550 : vector<4x128xf32>
    %552 = math.exp %551 : vector<4x128xf32>
    %cst_320 = arith.constant 1.000000e+00 : f32
    %553 = vector.broadcast %cst_320 : f32 to vector<4x128xf32>
    %554 = arith.addf %553, %552 : vector<4x128xf32>
    %555 = arith.divf %553, %554 : vector<4x128xf32>
    %556 = arith.mulf %546, %555 : vector<4x128xf32>
    %557 = vector.broadcast %115 : vector<4x1xf32> to vector<4x128xf32>
    %558 = arith.mulf %15, %557 : vector<4x128xf32>
    %cst_321 = arith.constant 1.000000e+01 : f32
    %559 = vector.broadcast %cst_321 : f32 to vector<4x128xf32>
    %560 = arith.mulf %3, %559 : vector<4x128xf32>
    %561 = vector.broadcast %161 : vector<4x1xf32> to vector<4x128xf32>
    %562 = arith.subf %560, %561 : vector<4x128xf32>
    %563 = arith.negf %562 : vector<4x128xf32>
    %564 = math.exp %563 : vector<4x128xf32>
    %cst_322 = arith.constant 1.000000e+00 : f32
    %565 = vector.broadcast %cst_322 : f32 to vector<4x128xf32>
    %566 = arith.addf %565, %564 : vector<4x128xf32>
    %567 = arith.divf %565, %566 : vector<4x128xf32>
    %568 = arith.mulf %558, %567 : vector<4x128xf32>
    %569 = arith.addf %556, %568 : vector<4x128xf32>
    %570 = vector.broadcast %117 : vector<4x1xf32> to vector<4x128xf32>
    %571 = arith.mulf %17, %570 : vector<4x128xf32>
    %cst_323 = arith.constant 1.000000e+01 : f32
    %572 = vector.broadcast %cst_323 : f32 to vector<4x128xf32>
    %573 = arith.mulf %5, %572 : vector<4x128xf32>
    %574 = vector.broadcast %161 : vector<4x1xf32> to vector<4x128xf32>
    %575 = arith.subf %573, %574 : vector<4x128xf32>
    %576 = arith.negf %575 : vector<4x128xf32>
    %577 = math.exp %576 : vector<4x128xf32>
    %cst_324 = arith.constant 1.000000e+00 : f32
    %578 = vector.broadcast %cst_324 : f32 to vector<4x128xf32>
    %579 = arith.addf %578, %577 : vector<4x128xf32>
    %580 = arith.divf %578, %579 : vector<4x128xf32>
    %581 = arith.mulf %571, %580 : vector<4x128xf32>
    %582 = arith.addf %569, %581 : vector<4x128xf32>
    %583 = vector.broadcast %119 : vector<4x1xf32> to vector<4x128xf32>
    %584 = arith.mulf %19, %583 : vector<4x128xf32>
    %cst_325 = arith.constant 1.000000e+01 : f32
    %585 = vector.broadcast %cst_325 : f32 to vector<4x128xf32>
    %586 = arith.mulf %7, %585 : vector<4x128xf32>
    %587 = vector.broadcast %161 : vector<4x1xf32> to vector<4x128xf32>
    %588 = arith.subf %586, %587 : vector<4x128xf32>
    %589 = arith.negf %588 : vector<4x128xf32>
    %590 = math.exp %589 : vector<4x128xf32>
    %cst_326 = arith.constant 1.000000e+00 : f32
    %591 = vector.broadcast %cst_326 : f32 to vector<4x128xf32>
    %592 = arith.addf %591, %590 : vector<4x128xf32>
    %593 = arith.divf %591, %592 : vector<4x128xf32>
    %594 = arith.mulf %584, %593 : vector<4x128xf32>
    %595 = arith.addf %582, %594 : vector<4x128xf32>
    %596 = vector.broadcast %121 : vector<4x1xf32> to vector<4x128xf32>
    %597 = arith.mulf %21, %596 : vector<4x128xf32>
    %cst_327 = arith.constant 1.000000e+01 : f32
    %598 = vector.broadcast %cst_327 : f32 to vector<4x128xf32>
    %599 = arith.mulf %9, %598 : vector<4x128xf32>
    %600 = vector.broadcast %161 : vector<4x1xf32> to vector<4x128xf32>
    %601 = arith.subf %599, %600 : vector<4x128xf32>
    %602 = arith.negf %601 : vector<4x128xf32>
    %603 = math.exp %602 : vector<4x128xf32>
    %cst_328 = arith.constant 1.000000e+00 : f32
    %604 = vector.broadcast %cst_328 : f32 to vector<4x128xf32>
    %605 = arith.addf %604, %603 : vector<4x128xf32>
    %606 = arith.divf %604, %605 : vector<4x128xf32>
    %607 = arith.mulf %597, %606 : vector<4x128xf32>
    %608 = arith.addf %595, %607 : vector<4x128xf32>
    %609 = vector.broadcast %123 : vector<4x1xf32> to vector<4x128xf32>
    %610 = arith.mulf %23, %609 : vector<4x128xf32>
    %cst_329 = arith.constant 1.000000e+01 : f32
    %611 = vector.broadcast %cst_329 : f32 to vector<4x128xf32>
    %612 = arith.mulf %11, %611 : vector<4x128xf32>
    %613 = vector.broadcast %161 : vector<4x1xf32> to vector<4x128xf32>
    %614 = arith.subf %612, %613 : vector<4x128xf32>
    %615 = arith.negf %614 : vector<4x128xf32>
    %616 = math.exp %615 : vector<4x128xf32>
    %cst_330 = arith.constant 1.000000e+00 : f32
    %617 = vector.broadcast %cst_330 : f32 to vector<4x128xf32>
    %618 = arith.addf %617, %616 : vector<4x128xf32>
    %619 = arith.divf %617, %618 : vector<4x128xf32>
    %620 = arith.mulf %610, %619 : vector<4x128xf32>
    %621 = arith.addf %608, %620 : vector<4x128xf32>
    %622 = vector.broadcast %113 : vector<4x1xf32> to vector<4x128xf32>
    %623 = arith.mulf %13, %622 : vector<4x128xf32>
    %624 = vector.broadcast %115 : vector<4x1xf32> to vector<4x128xf32>
    %625 = arith.mulf %15, %624 : vector<4x128xf32>
    %626 = arith.addf %623, %625 : vector<4x128xf32>
    %627 = vector.broadcast %117 : vector<4x1xf32> to vector<4x128xf32>
    %628 = arith.mulf %17, %627 : vector<4x128xf32>
    %629 = arith.addf %626, %628 : vector<4x128xf32>
    %630 = vector.broadcast %119 : vector<4x1xf32> to vector<4x128xf32>
    %631 = arith.mulf %19, %630 : vector<4x128xf32>
    %632 = arith.addf %629, %631 : vector<4x128xf32>
    %633 = vector.broadcast %121 : vector<4x1xf32> to vector<4x128xf32>
    %634 = arith.mulf %21, %633 : vector<4x128xf32>
    %635 = arith.addf %632, %634 : vector<4x128xf32>
    %636 = vector.broadcast %123 : vector<4x1xf32> to vector<4x128xf32>
    %637 = arith.mulf %23, %636 : vector<4x128xf32>
    %638 = arith.addf %635, %637 : vector<4x128xf32>
    %639 = vector.broadcast %125 : vector<4x1xf32> to vector<4x128xf32>
    %640 = arith.mulf %13, %639 : vector<4x128xf32>
    %cst_331 = arith.constant 1.000000e+01 : f32
    %641 = vector.broadcast %cst_331 : f32 to vector<4x128xf32>
    %642 = arith.mulf %1, %641 : vector<4x128xf32>
    %643 = vector.broadcast %163 : vector<4x1xf32> to vector<4x128xf32>
    %644 = arith.subf %643, %642 : vector<4x128xf32>
    %645 = arith.negf %644 : vector<4x128xf32>
    %646 = math.exp %645 : vector<4x128xf32>
    %cst_332 = arith.constant 1.000000e+00 : f32
    %647 = vector.broadcast %cst_332 : f32 to vector<4x128xf32>
    %648 = arith.addf %647, %646 : vector<4x128xf32>
    %649 = arith.divf %647, %648 : vector<4x128xf32>
    %650 = arith.mulf %640, %649 : vector<4x128xf32>
    %651 = vector.broadcast %127 : vector<4x1xf32> to vector<4x128xf32>
    %652 = arith.mulf %15, %651 : vector<4x128xf32>
    %cst_333 = arith.constant 1.000000e+01 : f32
    %653 = vector.broadcast %cst_333 : f32 to vector<4x128xf32>
    %654 = arith.mulf %3, %653 : vector<4x128xf32>
    %655 = vector.broadcast %163 : vector<4x1xf32> to vector<4x128xf32>
    %656 = arith.subf %655, %654 : vector<4x128xf32>
    %657 = arith.negf %656 : vector<4x128xf32>
    %658 = math.exp %657 : vector<4x128xf32>
    %cst_334 = arith.constant 1.000000e+00 : f32
    %659 = vector.broadcast %cst_334 : f32 to vector<4x128xf32>
    %660 = arith.addf %659, %658 : vector<4x128xf32>
    %661 = arith.divf %659, %660 : vector<4x128xf32>
    %662 = arith.mulf %652, %661 : vector<4x128xf32>
    %663 = arith.addf %650, %662 : vector<4x128xf32>
    %664 = vector.broadcast %129 : vector<4x1xf32> to vector<4x128xf32>
    %665 = arith.mulf %17, %664 : vector<4x128xf32>
    %cst_335 = arith.constant 1.000000e+01 : f32
    %666 = vector.broadcast %cst_335 : f32 to vector<4x128xf32>
    %667 = arith.mulf %5, %666 : vector<4x128xf32>
    %668 = vector.broadcast %163 : vector<4x1xf32> to vector<4x128xf32>
    %669 = arith.subf %668, %667 : vector<4x128xf32>
    %670 = arith.negf %669 : vector<4x128xf32>
    %671 = math.exp %670 : vector<4x128xf32>
    %cst_336 = arith.constant 1.000000e+00 : f32
    %672 = vector.broadcast %cst_336 : f32 to vector<4x128xf32>
    %673 = arith.addf %672, %671 : vector<4x128xf32>
    %674 = arith.divf %672, %673 : vector<4x128xf32>
    %675 = arith.mulf %665, %674 : vector<4x128xf32>
    %676 = arith.addf %663, %675 : vector<4x128xf32>
    %677 = vector.broadcast %131 : vector<4x1xf32> to vector<4x128xf32>
    %678 = arith.mulf %19, %677 : vector<4x128xf32>
    %cst_337 = arith.constant 1.000000e+01 : f32
    %679 = vector.broadcast %cst_337 : f32 to vector<4x128xf32>
    %680 = arith.mulf %7, %679 : vector<4x128xf32>
    %681 = vector.broadcast %163 : vector<4x1xf32> to vector<4x128xf32>
    %682 = arith.subf %681, %680 : vector<4x128xf32>
    %683 = arith.negf %682 : vector<4x128xf32>
    %684 = math.exp %683 : vector<4x128xf32>
    %cst_338 = arith.constant 1.000000e+00 : f32
    %685 = vector.broadcast %cst_338 : f32 to vector<4x128xf32>
    %686 = arith.addf %685, %684 : vector<4x128xf32>
    %687 = arith.divf %685, %686 : vector<4x128xf32>
    %688 = arith.mulf %678, %687 : vector<4x128xf32>
    %689 = arith.addf %676, %688 : vector<4x128xf32>
    %690 = vector.broadcast %133 : vector<4x1xf32> to vector<4x128xf32>
    %691 = arith.mulf %21, %690 : vector<4x128xf32>
    %cst_339 = arith.constant 1.000000e+01 : f32
    %692 = vector.broadcast %cst_339 : f32 to vector<4x128xf32>
    %693 = arith.mulf %9, %692 : vector<4x128xf32>
    %694 = vector.broadcast %163 : vector<4x1xf32> to vector<4x128xf32>
    %695 = arith.subf %694, %693 : vector<4x128xf32>
    %696 = arith.negf %695 : vector<4x128xf32>
    %697 = math.exp %696 : vector<4x128xf32>
    %cst_340 = arith.constant 1.000000e+00 : f32
    %698 = vector.broadcast %cst_340 : f32 to vector<4x128xf32>
    %699 = arith.addf %698, %697 : vector<4x128xf32>
    %700 = arith.divf %698, %699 : vector<4x128xf32>
    %701 = arith.mulf %691, %700 : vector<4x128xf32>
    %702 = arith.addf %689, %701 : vector<4x128xf32>
    %703 = vector.broadcast %135 : vector<4x1xf32> to vector<4x128xf32>
    %704 = arith.mulf %23, %703 : vector<4x128xf32>
    %cst_341 = arith.constant 1.000000e+01 : f32
    %705 = vector.broadcast %cst_341 : f32 to vector<4x128xf32>
    %706 = arith.mulf %11, %705 : vector<4x128xf32>
    %707 = vector.broadcast %163 : vector<4x1xf32> to vector<4x128xf32>
    %708 = arith.subf %707, %706 : vector<4x128xf32>
    %709 = arith.negf %708 : vector<4x128xf32>
    %710 = math.exp %709 : vector<4x128xf32>
    %cst_342 = arith.constant 1.000000e+00 : f32
    %711 = vector.broadcast %cst_342 : f32 to vector<4x128xf32>
    %712 = arith.addf %711, %710 : vector<4x128xf32>
    %713 = arith.divf %711, %712 : vector<4x128xf32>
    %714 = arith.mulf %704, %713 : vector<4x128xf32>
    %715 = arith.addf %702, %714 : vector<4x128xf32>
    %716 = vector.broadcast %125 : vector<4x1xf32> to vector<4x128xf32>
    %717 = arith.mulf %13, %716 : vector<4x128xf32>
    %718 = vector.broadcast %127 : vector<4x1xf32> to vector<4x128xf32>
    %719 = arith.mulf %15, %718 : vector<4x128xf32>
    %720 = arith.addf %717, %719 : vector<4x128xf32>
    %721 = vector.broadcast %129 : vector<4x1xf32> to vector<4x128xf32>
    %722 = arith.mulf %17, %721 : vector<4x128xf32>
    %723 = arith.addf %720, %722 : vector<4x128xf32>
    %724 = vector.broadcast %131 : vector<4x1xf32> to vector<4x128xf32>
    %725 = arith.mulf %19, %724 : vector<4x128xf32>
    %726 = arith.addf %723, %725 : vector<4x128xf32>
    %727 = vector.broadcast %133 : vector<4x1xf32> to vector<4x128xf32>
    %728 = arith.mulf %21, %727 : vector<4x128xf32>
    %729 = arith.addf %726, %728 : vector<4x128xf32>
    %730 = vector.broadcast %135 : vector<4x1xf32> to vector<4x128xf32>
    %731 = arith.mulf %23, %730 : vector<4x128xf32>
    %732 = arith.addf %729, %731 : vector<4x128xf32>
    %cst_343 = arith.constant 0.00999999977 : f32
    %733 = vector.broadcast %cst_343 : f32 to vector<4x128xf32>
    %734 = arith.addf %638, %733 : vector<4x128xf32>
    %735 = tpu.reciprocal %734 : vector<4x128xf32> -> vector<4x128xf32>
    %736 = arith.mulf %621, %735 : vector<4x128xf32>
    %cst_344 = arith.constant 0.00999999977 : f32
    %737 = vector.broadcast %cst_344 : f32 to vector<4x128xf32>
    %738 = arith.addf %732, %737 : vector<4x128xf32>
    %739 = tpu.reciprocal %738 : vector<4x128xf32> -> vector<4x128xf32>
    %740 = arith.mulf %715, %739 : vector<4x128xf32>
    %c0_345 = arith.constant 0 : index
    %c0_346 = arith.constant 0 : index
    %741 = vector.load %arg3[%c0_345, %c0_346] : memref<10x128xf32, #tpu.memory_space<vmem>>, vector<10x128xf32>
    %c0_347 = arith.constant 0 : index
    %c0_348 = arith.constant 0 : index
    %c0_349 = arith.constant 0 : index
    %c0_350 = arith.constant 0 : index
    %742 = vector.load %arg7[%c0_347, %c0_348, %c0_349, %c0_350] : memref<2x12x4x1xf32, #tpu.memory_space<vmem>>, vector<1x1x4x1xf32>
    %743 = vector.shape_cast %742 : vector<1x1x4x1xf32> to vector<4x1xf32>
    %744 = vector.broadcast %743 : vector<4x1xf32> to vector<4x128xf32>
    %745 = arith.mulf %744, %182 : vector<4x128xf32>
    %c0_351 = arith.constant 0 : index
    %c1_352 = arith.constant 1 : index
    %c0_353 = arith.constant 0 : index
    %c0_354 = arith.constant 0 : index
    %746 = vector.load %arg7[%c0_351, %c1_352, %c0_353, %c0_354] : memref<2x12x4x1xf32, #tpu.memory_space<vmem>>, vector<1x1x4x1xf32>
    %747 = vector.shape_cast %746 : vector<1x1x4x1xf32> to vector<4x1xf32>
    %748 = vector.broadcast %747 : vector<4x1xf32> to vector<4x128xf32>
    %749 = arith.mulf %748, %256 : vector<4x128xf32>
    %750 = arith.addf %745, %749 : vector<4x128xf32>
    %c0_355 = arith.constant 0 : index
    %c2_356 = arith.constant 2 : index
    %c0_357 = arith.constant 0 : index
    %c0_358 = arith.constant 0 : index
    %751 = vector.load %arg7[%c0_355, %c2_356, %c0_357, %c0_358] : memref<2x12x4x1xf32, #tpu.memory_space<vmem>>, vector<1x1x4x1xf32>
    %752 = vector.shape_cast %751 : vector<1x1x4x1xf32> to vector<4x1xf32>
    %753 = vector.broadcast %752 : vector<4x1xf32> to vector<4x128xf32>
    %754 = arith.mulf %753, %282 : vector<4x128xf32>
    %755 = arith.addf %750, %754 : vector<4x128xf32>
    %c0_359 = arith.constant 0 : index
    %c3_360 = arith.constant 3 : index
    %c0_361 = arith.constant 0 : index
    %c0_362 = arith.constant 0 : index
    %756 = vector.load %arg7[%c0_359, %c3_360, %c0_361, %c0_362] : memref<2x12x4x1xf32, #tpu.memory_space<vmem>>, vector<1x1x4x1xf32>
    %757 = vector.shape_cast %756 : vector<1x1x4x1xf32> to vector<4x1xf32>
    %758 = vector.broadcast %757 : vector<4x1xf32> to vector<4x128xf32>
    %759 = arith.mulf %758, %301 : vector<4x128xf32>
    %760 = arith.addf %755, %759 : vector<4x128xf32>
    %c0_363 = arith.constant 0 : index
    %c4_364 = arith.constant 4 : index
    %c0_365 = arith.constant 0 : index
    %c0_366 = arith.constant 0 : index
    %761 = vector.load %arg7[%c0_363, %c4_364, %c0_365, %c0_366] : memref<2x12x4x1xf32, #tpu.memory_space<vmem>>, vector<1x1x4x1xf32>
    %762 = vector.shape_cast %761 : vector<1x1x4x1xf32> to vector<4x1xf32>
    %763 = vector.broadcast %762 : vector<4x1xf32> to vector<4x128xf32>
    %764 = arith.mulf %763, %339 : vector<4x128xf32>
    %765 = arith.addf %760, %764 : vector<4x128xf32>
    %c0_367 = arith.constant 0 : index
    %c5_368 = arith.constant 5 : index
    %c0_369 = arith.constant 0 : index
    %c0_370 = arith.constant 0 : index
    %766 = vector.load %arg7[%c0_367, %c5_368, %c0_369, %c0_370] : memref<2x12x4x1xf32, #tpu.memory_space<vmem>>, vector<1x1x4x1xf32>
    %767 = vector.shape_cast %766 : vector<1x1x4x1xf32> to vector<4x1xf32>
    %768 = vector.broadcast %767 : vector<4x1xf32> to vector<4x128xf32>
    %769 = arith.mulf %768, %365 : vector<4x128xf32>
    %770 = arith.addf %765, %769 : vector<4x128xf32>
    %c0_371 = arith.constant 0 : index
    %c6_372 = arith.constant 6 : index
    %c0_373 = arith.constant 0 : index
    %c0_374 = arith.constant 0 : index
    %771 = vector.load %arg7[%c0_371, %c6_372, %c0_373, %c0_374] : memref<2x12x4x1xf32, #tpu.memory_space<vmem>>, vector<1x1x4x1xf32>
    %772 = vector.shape_cast %771 : vector<1x1x4x1xf32> to vector<4x1xf32>
    %773 = vector.broadcast %772 : vector<4x1xf32> to vector<4x128xf32>
    %774 = arith.mulf %773, %541 : vector<4x128xf32>
    %775 = arith.addf %770, %774 : vector<4x128xf32>
    %c0_375 = arith.constant 0 : index
    %c7_376 = arith.constant 7 : index
    %c0_377 = arith.constant 0 : index
    %c0_378 = arith.constant 0 : index
    %776 = vector.load %arg7[%c0_375, %c7_376, %c0_377, %c0_378] : memref<2x12x4x1xf32, #tpu.memory_space<vmem>>, vector<1x1x4x1xf32>
    %777 = vector.shape_cast %776 : vector<1x1x4x1xf32> to vector<4x1xf32>
    %778 = vector.broadcast %777 : vector<4x1xf32> to vector<4x128xf32>
    %779 = arith.mulf %778, %544 : vector<4x128xf32>
    %780 = arith.addf %775, %779 : vector<4x128xf32>
    %c0_379 = arith.constant 0 : index
    %c8_380 = arith.constant 8 : index
    %c0_381 = arith.constant 0 : index
    %c0_382 = arith.constant 0 : index
    %781 = vector.load %arg7[%c0_379, %c8_380, %c0_381, %c0_382] : memref<2x12x4x1xf32, #tpu.memory_space<vmem>>, vector<1x1x4x1xf32>
    %782 = vector.shape_cast %781 : vector<1x1x4x1xf32> to vector<4x1xf32>
    %783 = vector.broadcast %782 : vector<4x1xf32> to vector<4x128xf32>
    %784 = arith.mulf %783, %392 : vector<4x128xf32>
    %785 = arith.addf %780, %784 : vector<4x128xf32>
    %c0_383 = arith.constant 0 : index
    %c9_384 = arith.constant 9 : index
    %c0_385 = arith.constant 0 : index
    %c0_386 = arith.constant 0 : index
    %786 = vector.load %arg7[%c0_383, %c9_384, %c0_385, %c0_386] : memref<2x12x4x1xf32, #tpu.memory_space<vmem>>, vector<1x1x4x1xf32>
    %787 = vector.shape_cast %786 : vector<1x1x4x1xf32> to vector<4x1xf32>
    %788 = vector.broadcast %787 : vector<4x1xf32> to vector<4x128xf32>
    %789 = arith.mulf %788, %423 : vector<4x128xf32>
    %790 = arith.addf %785, %789 : vector<4x128xf32>
    %c0_387 = arith.constant 0 : index
    %c10 = arith.constant 10 : index
    %c0_388 = arith.constant 0 : index
    %c0_389 = arith.constant 0 : index
    %791 = vector.load %arg7[%c0_387, %c10, %c0_388, %c0_389] : memref<2x12x4x1xf32, #tpu.memory_space<vmem>>, vector<1x1x4x1xf32>
    %792 = vector.shape_cast %791 : vector<1x1x4x1xf32> to vector<4x1xf32>
    %793 = vector.broadcast %792 : vector<4x1xf32> to vector<4x128xf32>
    %794 = arith.mulf %793, %736 : vector<4x128xf32>
    %795 = arith.addf %790, %794 : vector<4x128xf32>
    %c0_390 = arith.constant 0 : index
    %c11 = arith.constant 11 : index
    %c0_391 = arith.constant 0 : index
    %c0_392 = arith.constant 0 : index
    %796 = vector.load %arg7[%c0_390, %c11, %c0_391, %c0_392] : memref<2x12x4x1xf32, #tpu.memory_space<vmem>>, vector<1x1x4x1xf32>
    %797 = vector.shape_cast %796 : vector<1x1x4x1xf32> to vector<4x1xf32>
    %798 = vector.broadcast %797 : vector<4x1xf32> to vector<4x128xf32>
    %799 = arith.mulf %798, %740 : vector<4x128xf32>
    %800 = arith.addf %795, %799 : vector<4x128xf32>
    %c0_393 = arith.constant 0 : index
    %c0_394 = arith.constant 0 : index
    %c0_395 = arith.constant 0 : index
    %801 = vector.load %arg6[%c0_393, %c0_394, %c0_395] : memref<2x10x1xf32, #tpu.memory_space<vmem>>, vector<1x10x1xf32>
    %802 = vector.shape_cast %801 : vector<1x10x1xf32> to vector<10x1xf32>
    %803 = vector.broadcast %802 : vector<10x1xf32> to vector<10x128xf32>
    %804 = arith.mulf %803, %741 : vector<10x128xf32>
    %cst_396 = arith.constant dense<0.000000e+00> : vector<128xf32>
    %805 = vector.multi_reduction <add>, %800, %cst_396 [0] : vector<4x128xf32> to vector<128xf32>
    %806 = vector.shape_cast %805 : vector<128xf32> to vector<1x128xf32>
    %cst_397 = arith.constant dense<0.000000e+00> : vector<128xf32>
    %807 = vector.multi_reduction <add>, %804, %cst_397 [0] : vector<10x128xf32> to vector<128xf32>
    %808 = vector.shape_cast %807 : vector<128xf32> to vector<1x128xf32>
    %809 = arith.addf %806, %808 : vector<1x128xf32>
    %c1_398 = arith.constant 1 : index
    %c0_399 = arith.constant 0 : index
    %c0_400 = arith.constant 0 : index
    %c0_401 = arith.constant 0 : index
    %810 = vector.load %arg7[%c1_398, %c0_399, %c0_400, %c0_401] : memref<2x12x4x1xf32, #tpu.memory_space<vmem>>, vector<1x1x4x1xf32>
    %811 = vector.shape_cast %810 : vector<1x1x4x1xf32> to vector<4x1xf32>
    %812 = vector.broadcast %811 : vector<4x1xf32> to vector<4x128xf32>
    %813 = arith.mulf %812, %182 : vector<4x128xf32>
    %c1_402 = arith.constant 1 : index
    %c1_403 = arith.constant 1 : index
    %c0_404 = arith.constant 0 : index
    %c0_405 = arith.constant 0 : index
    %814 = vector.load %arg7[%c1_402, %c1_403, %c0_404, %c0_405] : memref<2x12x4x1xf32, #tpu.memory_space<vmem>>, vector<1x1x4x1xf32>
    %815 = vector.shape_cast %814 : vector<1x1x4x1xf32> to vector<4x1xf32>
    %816 = vector.broadcast %815 : vector<4x1xf32> to vector<4x128xf32>
    %817 = arith.mulf %816, %256 : vector<4x128xf32>
    %818 = arith.addf %813, %817 : vector<4x128xf32>
    %c1_406 = arith.constant 1 : index
    %c2_407 = arith.constant 2 : index
    %c0_408 = arith.constant 0 : index
    %c0_409 = arith.constant 0 : index
    %819 = vector.load %arg7[%c1_406, %c2_407, %c0_408, %c0_409] : memref<2x12x4x1xf32, #tpu.memory_space<vmem>>, vector<1x1x4x1xf32>
    %820 = vector.shape_cast %819 : vector<1x1x4x1xf32> to vector<4x1xf32>
    %821 = vector.broadcast %820 : vector<4x1xf32> to vector<4x128xf32>
    %822 = arith.mulf %821, %282 : vector<4x128xf32>
    %823 = arith.addf %818, %822 : vector<4x128xf32>
    %c1_410 = arith.constant 1 : index
    %c3_411 = arith.constant 3 : index
    %c0_412 = arith.constant 0 : index
    %c0_413 = arith.constant 0 : index
    %824 = vector.load %arg7[%c1_410, %c3_411, %c0_412, %c0_413] : memref<2x12x4x1xf32, #tpu.memory_space<vmem>>, vector<1x1x4x1xf32>
    %825 = vector.shape_cast %824 : vector<1x1x4x1xf32> to vector<4x1xf32>
    %826 = vector.broadcast %825 : vector<4x1xf32> to vector<4x128xf32>
    %827 = arith.mulf %826, %301 : vector<4x128xf32>
    %828 = arith.addf %823, %827 : vector<4x128xf32>
    %c1_414 = arith.constant 1 : index
    %c4_415 = arith.constant 4 : index
    %c0_416 = arith.constant 0 : index
    %c0_417 = arith.constant 0 : index
    %829 = vector.load %arg7[%c1_414, %c4_415, %c0_416, %c0_417] : memref<2x12x4x1xf32, #tpu.memory_space<vmem>>, vector<1x1x4x1xf32>
    %830 = vector.shape_cast %829 : vector<1x1x4x1xf32> to vector<4x1xf32>
    %831 = vector.broadcast %830 : vector<4x1xf32> to vector<4x128xf32>
    %832 = arith.mulf %831, %339 : vector<4x128xf32>
    %833 = arith.addf %828, %832 : vector<4x128xf32>
    %c1_418 = arith.constant 1 : index
    %c5_419 = arith.constant 5 : index
    %c0_420 = arith.constant 0 : index
    %c0_421 = arith.constant 0 : index
    %834 = vector.load %arg7[%c1_418, %c5_419, %c0_420, %c0_421] : memref<2x12x4x1xf32, #tpu.memory_space<vmem>>, vector<1x1x4x1xf32>
    %835 = vector.shape_cast %834 : vector<1x1x4x1xf32> to vector<4x1xf32>
    %836 = vector.broadcast %835 : vector<4x1xf32> to vector<4x128xf32>
    %837 = arith.mulf %836, %365 : vector<4x128xf32>
    %838 = arith.addf %833, %837 : vector<4x128xf32>
    %c1_422 = arith.constant 1 : index
    %c6_423 = arith.constant 6 : index
    %c0_424 = arith.constant 0 : index
    %c0_425 = arith.constant 0 : index
    %839 = vector.load %arg7[%c1_422, %c6_423, %c0_424, %c0_425] : memref<2x12x4x1xf32, #tpu.memory_space<vmem>>, vector<1x1x4x1xf32>
    %840 = vector.shape_cast %839 : vector<1x1x4x1xf32> to vector<4x1xf32>
    %841 = vector.broadcast %840 : vector<4x1xf32> to vector<4x128xf32>
    %842 = arith.mulf %841, %541 : vector<4x128xf32>
    %843 = arith.addf %838, %842 : vector<4x128xf32>
    %c1_426 = arith.constant 1 : index
    %c7_427 = arith.constant 7 : index
    %c0_428 = arith.constant 0 : index
    %c0_429 = arith.constant 0 : index
    %844 = vector.load %arg7[%c1_426, %c7_427, %c0_428, %c0_429] : memref<2x12x4x1xf32, #tpu.memory_space<vmem>>, vector<1x1x4x1xf32>
    %845 = vector.shape_cast %844 : vector<1x1x4x1xf32> to vector<4x1xf32>
    %846 = vector.broadcast %845 : vector<4x1xf32> to vector<4x128xf32>
    %847 = arith.mulf %846, %544 : vector<4x128xf32>
    %848 = arith.addf %843, %847 : vector<4x128xf32>
    %c1_430 = arith.constant 1 : index
    %c8_431 = arith.constant 8 : index
    %c0_432 = arith.constant 0 : index
    %c0_433 = arith.constant 0 : index
    %849 = vector.load %arg7[%c1_430, %c8_431, %c0_432, %c0_433] : memref<2x12x4x1xf32, #tpu.memory_space<vmem>>, vector<1x1x4x1xf32>
    %850 = vector.shape_cast %849 : vector<1x1x4x1xf32> to vector<4x1xf32>
    %851 = vector.broadcast %850 : vector<4x1xf32> to vector<4x128xf32>
    %852 = arith.mulf %851, %392 : vector<4x128xf32>
    %853 = arith.addf %848, %852 : vector<4x128xf32>
    %c1_434 = arith.constant 1 : index
    %c9_435 = arith.constant 9 : index
    %c0_436 = arith.constant 0 : index
    %c0_437 = arith.constant 0 : index
    %854 = vector.load %arg7[%c1_434, %c9_435, %c0_436, %c0_437] : memref<2x12x4x1xf32, #tpu.memory_space<vmem>>, vector<1x1x4x1xf32>
    %855 = vector.shape_cast %854 : vector<1x1x4x1xf32> to vector<4x1xf32>
    %856 = vector.broadcast %855 : vector<4x1xf32> to vector<4x128xf32>
    %857 = arith.mulf %856, %423 : vector<4x128xf32>
    %858 = arith.addf %853, %857 : vector<4x128xf32>
    %c1_438 = arith.constant 1 : index
    %c10_439 = arith.constant 10 : index
    %c0_440 = arith.constant 0 : index
    %c0_441 = arith.constant 0 : index
    %859 = vector.load %arg7[%c1_438, %c10_439, %c0_440, %c0_441] : memref<2x12x4x1xf32, #tpu.memory_space<vmem>>, vector<1x1x4x1xf32>
    %860 = vector.shape_cast %859 : vector<1x1x4x1xf32> to vector<4x1xf32>
    %861 = vector.broadcast %860 : vector<4x1xf32> to vector<4x128xf32>
    %862 = arith.mulf %861, %736 : vector<4x128xf32>
    %863 = arith.addf %858, %862 : vector<4x128xf32>
    %c1_442 = arith.constant 1 : index
    %c11_443 = arith.constant 11 : index
    %c0_444 = arith.constant 0 : index
    %c0_445 = arith.constant 0 : index
    %864 = vector.load %arg7[%c1_442, %c11_443, %c0_444, %c0_445] : memref<2x12x4x1xf32, #tpu.memory_space<vmem>>, vector<1x1x4x1xf32>
    %865 = vector.shape_cast %864 : vector<1x1x4x1xf32> to vector<4x1xf32>
    %866 = vector.broadcast %865 : vector<4x1xf32> to vector<4x128xf32>
    %867 = arith.mulf %866, %740 : vector<4x128xf32>
    %868 = arith.addf %863, %867 : vector<4x128xf32>
    %c1_446 = arith.constant 1 : index
    %c0_447 = arith.constant 0 : index
    %c0_448 = arith.constant 0 : index
    %869 = vector.load %arg6[%c1_446, %c0_447, %c0_448] : memref<2x10x1xf32, #tpu.memory_space<vmem>>, vector<1x10x1xf32>
    %870 = vector.shape_cast %869 : vector<1x10x1xf32> to vector<10x1xf32>
    %871 = vector.broadcast %870 : vector<10x1xf32> to vector<10x128xf32>
    %872 = arith.mulf %871, %741 : vector<10x128xf32>
    %cst_449 = arith.constant dense<0.000000e+00> : vector<128xf32>
    %873 = vector.multi_reduction <add>, %868, %cst_449 [0] : vector<4x128xf32> to vector<128xf32>
    %874 = vector.shape_cast %873 : vector<128xf32> to vector<1x128xf32>
    %cst_450 = arith.constant dense<0.000000e+00> : vector<128xf32>
    %875 = vector.multi_reduction <add>, %872, %cst_450 [0] : vector<10x128xf32> to vector<128xf32>
    %876 = vector.shape_cast %875 : vector<128xf32> to vector<1x128xf32>
    %877 = arith.addf %874, %876 : vector<1x128xf32>
    %878 = tpu.concatenate %809, %877 in 0 : vector<1x128xf32>, vector<1x128xf32> -> vector<2x128xf32>
    %c0_451 = arith.constant 0 : index
    %c0_452 = arith.constant 0 : index
    %879 = vector.load %arg8[%c0_451, %c0_452] : memref<2x1xf32, #tpu.memory_space<vmem>>, vector<2x1xf32>
    %880 = vector.broadcast %879 : vector<2x1xf32> to vector<2x128xf32>
    %881 = arith.addf %878, %880 : vector<2x128xf32>
    %c0_453 = arith.constant 0 : index
    %c0_454 = arith.constant 0 : index
    %882 = vector.load %arg9[%c0_453, %c0_454] : memref<2x128xf32, #tpu.memory_space<vmem>>, vector<2x128xf32>
    tpu.vector_store %arg9[%c0_453, %c0_454], %881 {strides = array<i32>} : memref<2x128xf32, #tpu.memory_space<vmem>>, vector<2x128xf32>,
    return
  }
  func.func @transform_0(%arg0: i32) -> (i32, i32, i32) {
    %c0_i32 = arith.constant 0 : i32
    %c0_i32_0 = arith.constant 0 : i32
    %c0_i32_1 = arith.constant 0 : i32
    return %c0_i32, %c0_i32_0, %arg0 : i32, i32, i32
  }
  func.func @transform_1(%arg0: i32) -> (i32, i32, i32) {
    %c0_i32 = arith.constant 0 : i32
    %c0_i32_0 = arith.constant 0 : i32
    %c0_i32_1 = arith.constant 0 : i32
    return %c0_i32, %c0_i32_0, %arg0 : i32, i32, i32
  }
  func.func @transform_2(%arg0: i32) -> (i32, i32) {
    %c0_i32 = arith.constant 0 : i32
    %c0_i32_0 = arith.constant 0 : i32
    return %c0_i32, %arg0 : i32, i32
  }
  func.func @transform_3(%arg0: i32) -> (i32, i32, i32, i32) {
    %c0_i32 = arith.constant 0 : i32
    %c0_i32_0 = arith.constant 0 : i32
    %c0_i32_1 = arith.constant 0 : i32
    %c0_i32_2 = arith.constant 0 : i32
    %c0_i32_3 = arith.constant 0 : i32
    return %c0_i32, %c0_i32_0, %c0_i32_1, %c0_i32_2 : i32, i32, i32, i32
  }
  func.func @transform_4(%arg0: i32) -> (i32, i32, i32) {
    %c0_i32 = arith.constant 0 : i32
    %c0_i32_0 = arith.constant 0 : i32
    %c0_i32_1 = arith.constant 0 : i32
    %c0_i32_2 = arith.constant 0 : i32
    return %c0_i32, %c0_i32_0, %c0_i32_1 : i32, i32, i32
  }
  func.func @transform_5(%arg0: i32) -> (i32, i32, i32) {
    %c0_i32 = arith.constant 0 : i32
    %c0_i32_0 = arith.constant 0 : i32
    %c0_i32_1 = arith.constant 0 : i32
    %c0_i32_2 = arith.constant 0 : i32
    return %c0_i32, %c0_i32_0, %c0_i32_1 : i32, i32, i32
  }
  func.func @transform_6(%arg0: i32) -> (i32, i32, i32, i32) {
    %c0_i32 = arith.constant 0 : i32
    %c0_i32_0 = arith.constant 0 : i32
    %c0_i32_1 = arith.constant 0 : i32
    %c0_i32_2 = arith.constant 0 : i32
    %c0_i32_3 = arith.constant 0 : i32
    return %c0_i32, %c0_i32_0, %c0_i32_1, %c0_i32_2 : i32, i32, i32, i32
  }
  func.func @transform_7(%arg0: i32) -> (i32, i32) {
    %c0_i32 = arith.constant 0 : i32
    %c0_i32_0 = arith.constant 0 : i32
    %c0_i32_1 = arith.constant 0 : i32
    return %c0_i32, %c0_i32_0 : i32, i32
  }
  func.func @transform_8(%arg0: i32) -> (i32, i32) {
    %c0_i32 = arith.constant 0 : i32
    %c0_i32_0 = arith.constant 0 : i32
    return %c0_i32, %arg0 : i32, i32
  }
}

</mosaic_0001>

<llo_original>
// kernel: tpu_custom_call.1
$region0: #{tpu_custom_call.1}
  #allocation0 [shape = 'u32[]', space=smem, size = 0x4, offset = 0x4, fixed_abs, tag = 'smem constant byte address 0x4 - core index']
  #allocation1 [shape = 'u32[144,128]{1,0:T(1,128)}', space=vmem, size = 0x12000, scoped, tag = 'internal scratch']
  %s0 = inlined_call_operand.vmem [shape: f32[6,4,128], index: 0, kind: input, shape index: {}]
  %s1 = inlined_call_operand.vmem [shape: f32[6,4,128], index: 1, kind: input, shape index: {}]
  %s2 = inlined_call_operand.vmem [shape: f32[10,128], index: 2, kind: input, shape index: {}]
  %s3 = inlined_call_operand.vmem [shape: f32[10,6,4,1], index: 3, kind: input, shape index: {}]
  %s4 = inlined_call_operand.vmem [shape: f32[8,4,1], index: 4, kind: input, shape index: {}]
  %s5 = inlined_call_operand.vmem [shape: f32[2,10,1], index: 5, kind: input, shape index: {}]
  %s6 = inlined_call_operand.vmem [shape: f32[2,12,4,1], index: 6, kind: input, shape index: {}]
  %s7 = inlined_call_operand.vmem [shape: f32[2,1], index: 7, kind: input, shape index: {}]
  %s8 = inlined_call_operand.hbm [shape: f32[2,128], index: 8, kind: output, shape index: {}]
  %s9 = sld [smem:[#allocation0]]
  $region42: #{tpu_custom_call.1} parent=0
    _
  %s11 = ssub.s32 1, %s9
  %s12 = scalar_select 0, %s11, %s9
  $region1: #{tpu_custom_call.1} parent=0
    #allocation2 [shape = 'u8[1024]{0}', space=vmem, size = 0x400, scoped, tag = 'output window, operand 0, single buffered']
    #allocation3 [shape = 's32[1]{0}', space=sflag, size = 0x4, scoped, tag = 'scoped memory for tpu_custom_call.1']
    %13 = vsyncpa [#allocation3], 0
    // Predicated region
    $region2: #{tpu_custom_call.1} parent=1 // pred_check
      _
    $region3: #{tpu_custom_call.1} parent=1 // pred_check_branch
      %15 = sbr.rel (0) target = $region5
    $region4: #{tpu_custom_call.1} parent=1 // pred_region
      _
    $region5: #{tpu_custom_call.1} parent=1 // pred_fallthru
      _
    // Predicated region
    $region6: #{tpu_custom_call.1} parent=1 // pred_check
      _
    $region7: #{tpu_custom_call.1} parent=1 // pred_check_branch
      %17 = sbr.rel (0) target = $region9
    $region8: #{tpu_custom_call.1} parent=1 // pred_region
      _
    $region9: #{tpu_custom_call.1} parent=1 // pred_fallthru
      _
    // Predicated region
    $region10: #{tpu_custom_call.1} parent=1 // pred_check
      _
    $region11: #{tpu_custom_call.1} parent=1 // pred_check_branch
      %19 = sbr.rel (0) target = $region13
    $region12: #{tpu_custom_call.1} parent=1 // pred_region
      _
    $region13: #{tpu_custom_call.1} parent=1 // pred_fallthru
      _
    // Predicated region
    $region14: #{tpu_custom_call.1} parent=1 // pred_check
      _
    $region15: #{tpu_custom_call.1} parent=1 // pred_check_branch
      %21 = sbr.rel (0) target = $region17
    $region16: #{tpu_custom_call.1} parent=1 // pred_region
      _
    $region17: #{tpu_custom_call.1} parent=1 // pred_fallthru
      _
    // Predicated region
    $region18: #{tpu_custom_call.1} parent=1 // pred_check
      _
    $region19: #{tpu_custom_call.1} parent=1 // pred_check_branch
      %23 = sbr.rel (0) target = $region21
    $region20: #{tpu_custom_call.1} parent=1 // pred_region
      _
    $region21: #{tpu_custom_call.1} parent=1 // pred_fallthru
      _
    // Predicated region
    $region22: #{tpu_custom_call.1} parent=1 // pred_check
      _
    $region23: #{tpu_custom_call.1} parent=1 // pred_check_branch
      %25 = sbr.rel (0) target = $region25
    $region24: #{tpu_custom_call.1} parent=1 // pred_region
      _
    $region25: #{tpu_custom_call.1} parent=1 // pred_fallthru
      _
    // Predicated region
    $region26: #{tpu_custom_call.1} parent=1 // pred_check
      _
    $region27: #{tpu_custom_call.1} parent=1 // pred_check_branch
      %27 = sbr.rel (0) target = $region29
    $region28: #{tpu_custom_call.1} parent=1 // pred_region
      _
    $region29: #{tpu_custom_call.1} parent=1 // pred_fallthru
      _
    // Predicated region
    $region30: #{tpu_custom_call.1} parent=1 // pred_check
      _
    $region31: #{tpu_custom_call.1} parent=1 // pred_check_branch
      %29 = sbr.rel (0) target = $region33
    $region32: #{tpu_custom_call.1} parent=1 // pred_region
      _
    $region33: #{tpu_custom_call.1} parent=1 // pred_fallthru
      _
    %v30 = vld [vmem:[%s0] sm:$0xf]
    %s31 = scalar_lea.vmem %s0, 4
    %v32 = vld [vmem:[%s31] sm:$0xf]
    %s33 = scalar_lea.vmem %s0, 8
    %v34 = vld [vmem:[%s33] sm:$0xf]
    %s35 = scalar_lea.vmem %s0, 12
    %v36 = vld [vmem:[%s35] sm:$0xf]
    %s37 = scalar_lea.vmem %s0, 16
    %v38 = vld [vmem:[%s37] sm:$0xf]
    %s39 = scalar_lea.vmem %s0, 20
    %v40 = vld [vmem:[%s39] sm:$0xf]
    %v41 = vld [vmem:[%s1] sm:$0xf]
    %s42 = scalar_lea.vmem %s1, 4
    %v43 = vld [vmem:[%s42] sm:$0xf]
    %s44 = scalar_lea.vmem %s1, 8
    %v45 = vld [vmem:[%s44] sm:$0xf]
    %s46 = scalar_lea.vmem %s1, 12
    %v47 = vld [vmem:[%s46] sm:$0xf]
    %s48 = scalar_lea.vmem %s1, 16
    %v49 = vld [vmem:[%s48] sm:$0xf]
    %s50 = scalar_lea.vmem %s1, 20
    %v51 = vld [vmem:[%s50] sm:$0xf]
    %v52 = vmul.f32 %v30, %v41
    %v53 = vmul.f32 %v32, %v43
    %v54 = vmul.f32 %v34, %v45
    %v55 = vmul.f32 %v36, %v47
    %v56 = vmul.f32 %v38, %v49
    %v57 = vmul.f32 %v40, %v51
    %v58 = vld [vmem:[%s3] sm:$0xf]
    %s59 = scalar_lea.vmem %s3, 4
    %v60 = vld [vmem:[%s59] sm:$0xf]
    %s61 = scalar_lea.vmem %s3, 8
    %v62 = vld [vmem:[%s61] sm:$0xf]
    %s63 = scalar_lea.vmem %s3, 12
    %v64 = vld [vmem:[%s63] sm:$0xf]
    %s65 = scalar_lea.vmem %s3, 16
    %v66 = vld [vmem:[%s65] sm:$0xf]
    %s67 = scalar_lea.vmem %s3, 20
    %v68 = vld [vmem:[%s67] sm:$0xf]
    %s69 = scalar_lea.vmem %s3, 24
    %v70 = vld [vmem:[%s69] sm:$0xf]
    %s71 = scalar_lea.vmem %s3, 28
    %v72 = vld [vmem:[%s71] sm:$0xf]
    %s73 = scalar_lea.vmem %s3, 32
    %v74 = vld [vmem:[%s73] sm:$0xf]
    %s75 = scalar_lea.vmem %s3, 36
    %v76 = vld [vmem:[%s75] sm:$0xf]
    %s77 = scalar_lea.vmem %s3, 40
    %v78 = vld [vmem:[%s77] sm:$0xf]
    %s79 = scalar_lea.vmem %s3, 44
    %v80 = vld [vmem:[%s79] sm:$0xf]
    %s81 = scalar_lea.vmem %s3, 48
    %v82 = vld [vmem:[%s81] sm:$0xf]
    %s83 = scalar_lea.vmem %s3, 52
    %v84 = vld [vmem:[%s83] sm:$0xf]
    %s85 = scalar_lea.vmem %s3, 56
    %v86 = vld [vmem:[%s85] sm:$0xf]
    %s87 = scalar_lea.vmem %s3, 60
    %v88 = vld [vmem:[%s87] sm:$0xf]
    %s89 = scalar_lea.vmem %s3, 64
    %v90 = vld [vmem:[%s89] sm:$0xf]
    %s91 = scalar_lea.vmem %s3, 68
    %v92 = vld [vmem:[%s91] sm:$0xf]
    %s93 = scalar_lea.vmem %s3, 72
    %v94 = vld [vmem:[%s93] sm:$0xf]
    %s95 = scalar_lea.vmem %s3, 76
    %v96 = vld [vmem:[%s95] sm:$0xf]
    %s97 = scalar_lea.vmem %s3, 80
    %v98 = vld [vmem:[%s97] sm:$0xf]
    %s99 = scalar_lea.vmem %s3, 84
    %v100 = vld [vmem:[%s99] sm:$0xf]
    %s101 = scalar_lea.vmem %s3, 88
    %v102 = vld [vmem:[%s101] sm:$0xf]
    %s103 = scalar_lea.vmem %s3, 92
    %v104 = vld [vmem:[%s103] sm:$0xf]
    %s105 = scalar_lea.vmem %s3, 96
    %v106 = vld [vmem:[%s105] sm:$0xf]
    %s107 = scalar_lea.vmem %s3, 100
    %v108 = vld [vmem:[%s107] sm:$0xf]
    %s109 = scalar_lea.vmem %s3, 104
    %v110 = vld [vmem:[%s109] sm:$0xf]
    %s111 = scalar_lea.vmem %s3, 108
    %v112 = vld [vmem:[%s111] sm:$0xf]
    %s113 = scalar_lea.vmem %s3, 112
    %v114 = vld [vmem:[%s113] sm:$0xf]
    %s115 = scalar_lea.vmem %s3, 116
    %v116 = vld [vmem:[%s115] sm:$0xf]
    %s117 = scalar_lea.vmem %s3, 120
    %v118 = vld [vmem:[%s117] sm:$0xf]
    %s119 = scalar_lea.vmem %s3, 124
    %v120 = vld [vmem:[%s119] sm:$0xf]
    %s121 = scalar_lea.vmem %s3, 128
    %v122 = vld [vmem:[%s121] sm:$0xf]
    %s123 = scalar_lea.vmem %s3, 132
    %v124 = vld [vmem:[%s123] sm:$0xf]
    %s125 = scalar_lea.vmem %s3, 136
    %v126 = vld [vmem:[%s125] sm:$0xf]
    %s127 = scalar_lea.vmem %s3, 144
    %v128 = vld [vmem:[%s127] sm:$0xf]
    %s129 = scalar_lea.vmem %s3, 148
    %v130 = vld [vmem:[%s129] sm:$0xf]
    %s131 = scalar_lea.vmem %s3, 152
    %v132 = vld [vmem:[%s131] sm:$0xf]
    %s133 = scalar_lea.vmem %s3, 156
    %v134 = vld [vmem:[%s133] sm:$0xf]
    %s135 = scalar_lea.vmem %s3, 160
    %v136 = vld [vmem:[%s135] sm:$0xf]
    %s137 = scalar_lea.vmem %s3, 164
    %v138 = vld [vmem:[%s137] sm:$0xf]
    %s139 = scalar_lea.vmem %s3, 168
    %v140 = vld [vmem:[%s139] sm:$0xf]
    %s141 = scalar_lea.vmem %s3, 172
    %v142 = vld [vmem:[%s141] sm:$0xf]
    %s143 = scalar_lea.vmem %s3, 176
    %v144 = vld [vmem:[%s143] sm:$0xf]
    %s145 = scalar_lea.vmem %s3, 180
    %v146 = vld [vmem:[%s145] sm:$0xf]
    %s147 = scalar_lea.vmem %s3, 184
    %v148 = vld [vmem:[%s147] sm:$0xf]
    %s149 = scalar_lea.vmem %s3, 188
    %v150 = vld [vmem:[%s149] sm:$0xf]
    %s151 = scalar_lea.vmem %s3, 192
    %v152 = vld [vmem:[%s151] sm:$0xf]
    %s153 = scalar_lea.vmem %s3, 196
    %v154 = vld [vmem:[%s153] sm:$0xf]
    %s155 = scalar_lea.vmem %s3, 200
    %v156 = vld [vmem:[%s155] sm:$0xf]
    %s157 = scalar_lea.vmem %s3, 204
    %v158 = vld [vmem:[%s157] sm:$0xf]
    %s159 = scalar_lea.vmem %s3, 208
    %v160 = vld [vmem:[%s159] sm:$0xf]
    %s161 = scalar_lea.vmem %s3, 212
    %v162 = vld [vmem:[%s161] sm:$0xf]
    %s163 = scalar_lea.vmem %s3, 216
    %v164 = vld [vmem:[%s163] sm:$0xf]
    %s165 = scalar_lea.vmem %s3, 220
    %v166 = vld [vmem:[%s165] sm:$0xf]
    %s167 = scalar_lea.vmem %s3, 224
    %v168 = vld [vmem:[%s167] sm:$0xf]
    %s169 = scalar_lea.vmem %s3, 228
    %v170 = vld [vmem:[%s169] sm:$0xf]
    %s171 = scalar_lea.vmem %s3, 232
    %v172 = vld [vmem:[%s171] sm:$0xf]
    %s173 = scalar_lea.vmem %s3, 236
    %v174 = vld [vmem:[%s173] sm:$0xf]
    %v175 = vld [vmem:[%s4] sm:$0xf]
    %s176 = scalar_lea.vmem %s4, 4
    %v177 = vld [vmem:[%s176] sm:$0xf]
    %s178 = scalar_lea.vmem %s4, 8
    %v179 = vld [vmem:[%s178] sm:$0xf]
    %s180 = scalar_lea.vmem %s4, 12
    %v181 = vld [vmem:[%s180] sm:$0xf]
    %s182 = scalar_lea.vmem %s4, 16
    %v183 = vld [vmem:[%s182] sm:$0xf]
    %s184 = scalar_lea.vmem %s4, 20
    %v185 = vld [vmem:[%s184] sm:$0xf]
    %s186 = scalar_lea.vmem %s4, 24
    %v187 = vld [vmem:[%s186] sm:$0xf]
    %s188 = scalar_lea.vmem %s4, 28
    %v189 = vld [vmem:[%s188] sm:$0xf]
    %191 = vset.pattern.permute.xlu0 0
    %192 = vperm.xlu0 %191, %v58
    %v193 = vpop.permute.xlu0 %192
    %v195 = vmul.f32 %v193, %v52
    %197 = vset.pattern.permute.xlu0 0
    %198 = vperm.xlu0 %197, %v60
    %v199 = vpop.permute.xlu0 %198
    %v201 = vmul.f32 %v199, %v53
    %v202 = vadd.f32 %v195, %v201
    %204 = vset.pattern.permute.xlu0 0
    %205 = vperm.xlu0 %204, %v62
    %v206 = vpop.permute.xlu0 %205
    %v208 = vmul.f32 %v206, %v54
    %v209 = vadd.f32 %v202, %v208
    %211 = vset.pattern.permute.xlu0 0
    %212 = vperm.xlu0 %211, %v64
    %v213 = vpop.permute.xlu0 %212
    %v215 = vmul.f32 %v213, %v55
    %v216 = vadd.f32 %v209, %v215
    %218 = vset.pattern.permute.xlu0 0
    %219 = vperm.xlu0 %218, %v66
    %v220 = vpop.permute.xlu0 %219
    %v222 = vmul.f32 %v220, %v56
    %v223 = vadd.f32 %v216, %v222
    %225 = vset.pattern.permute.xlu0 0
    %226 = vperm.xlu0 %225, %v68
    %v227 = vpop.permute.xlu0 %226
    %v229 = vmul.f32 %v227, %v57
    %v230 = vadd.f32 %v223, %v229
    %232 = vset.pattern.permute.xlu0 0
    %233 = vperm.xlu0 %232, %v175
    %v234 = vpop.permute.xlu0 %233
    %v236 = vmul.f32 %v230, %v234
    %v237 = vadd.f32 %v52, %v53
    %v238 = vadd.f32 %v237, %v54
    %v239 = vadd.f32 %v238, %v55
    %v240 = vadd.f32 %v239, %v56
    %v241 = vadd.f32 %v240, %v57
    %v242 = vmul.f32 %v241, 0.16666667
    %244 = vset.pattern.permute.xlu0 0
    %245 = vperm.xlu0 %244, %v70
    %v246 = vpop.permute.xlu0 %245
    %v248 = vmul.f32 %v41, %v246
    %250 = vset.pattern.permute.xlu0 0
    %251 = vperm.xlu0 %250, %v72
    %v252 = vpop.permute.xlu0 %251
    %v254 = vmul.f32 %v43, %v252
    %256 = vset.pattern.permute.xlu0 0
    %257 = vperm.xlu0 %256, %v74
    %v258 = vpop.permute.xlu0 %257
    %v260 = vmul.f32 %v45, %v258
    %262 = vset.pattern.permute.xlu0 0
    %263 = vperm.xlu0 %262, %v76
    %v264 = vpop.permute.xlu0 %263
    %v266 = vmul.f32 %v47, %v264
    %268 = vset.pattern.permute.xlu0 0
    %269 = vperm.xlu0 %268, %v78
    %v270 = vpop.permute.xlu0 %269
    %v272 = vmul.f32 %v49, %v270
    %274 = vset.pattern.permute.xlu0 0
    %275 = vperm.xlu0 %274, %v80
    %v276 = vpop.permute.xlu0 %275
    %v278 = vmul.f32 %v51, %v276
    %v279 = vsub.f32 %v30, %v242
    %v280 = vmul.f32 %v279, %v279
    %v281 = vmul.f32 %v248, %v280
    %v282 = vsub.f32 %v32, %v242
    %v283 = vmul.f32 %v282, %v282
    %v284 = vmul.f32 %v254, %v283
    %v285 = vadd.f32 %v281, %v284
    %v286 = vsub.f32 %v34, %v242
    %v287 = vmul.f32 %v286, %v286
    %v288 = vmul.f32 %v260, %v287
    %v289 = vadd.f32 %v285, %v288
    %v290 = vsub.f32 %v36, %v242
    %v291 = vmul.f32 %v290, %v290
    %v292 = vmul.f32 %v266, %v291
    %v293 = vadd.f32 %v289, %v292
    %v294 = vsub.f32 %v38, %v242
    %v295 = vmul.f32 %v294, %v294
    %v296 = vmul.f32 %v272, %v295
    %v297 = vadd.f32 %v293, %v296
    %v298 = vsub.f32 %v40, %v242
    %v299 = vmul.f32 %v298, %v298
    %v300 = vmul.f32 %v278, %v299
    %v301 = vadd.f32 %v297, %v300
    %v302 = vadd.f32 %v248, %v254
    %v303 = vadd.f32 %v302, %v260
    %v304 = vadd.f32 %v303, %v266
    %v305 = vadd.f32 %v304, %v272
    %v306 = vadd.f32 %v305, %v278
    %308 = vset.pattern.permute.xlu0 0
    %309 = vperm.xlu0 %308, %v164
    %v310 = vpop.permute.xlu0 %309
    %v312 = vmul.f32 %v41, %v310
    %314 = vset.pattern.permute.xlu0 0
    %315 = vperm.xlu0 %314, %v166
    %v316 = vpop.permute.xlu0 %315
    %v318 = vmul.f32 %v43, %v316
    %v319 = vadd.f32 %v312, %v318
    %321 = vset.pattern.permute.xlu0 0
    %322 = vperm.xlu0 %321, %v168
    %v323 = vpop.permute.xlu0 %322
    %v325 = vmul.f32 %v45, %v323
    %v326 = vadd.f32 %v319, %v325
    %328 = vset.pattern.permute.xlu0 0
    %329 = vperm.xlu0 %328, %v170
    %v330 = vpop.permute.xlu0 %329
    %v332 = vmul.f32 %v47, %v330
    %v333 = vadd.f32 %v326, %v332
    %335 = vset.pattern.permute.xlu0 0
    %336 = vperm.xlu0 %335, %v172
    %v337 = vpop.permute.xlu0 %336
    %v339 = vmul.f32 %v49, %v337
    %v340 = vadd.f32 %v333, %v339
    %342 = vset.pattern.permute.xlu0 0
    %343 = vperm.xlu0 %342, %v174
    %v344 = vpop.permute.xlu0 %343
    %v346 = vmul.f32 %v51, %v344
    %v347 = vadd.f32 %v340, %v346
    %v348 = vmul.f32 %v306, %v306
    %v349 = vadd.f32 %v348, %v347
    %v350 = vadd.f32 %v349, 0.01
    %v351 = vrcp.pop %v350
    %v352 = vmul.f32 %v348, %v351
    %v353 = vadd.f32 %v352, 0.01
    %v354 = vrcp.pop %v353
    %v355 = vmul.f32 %v301, %v354
    %357 = vset.pattern.permute.xlu0 0
    %358 = vperm.xlu0 %357, %v82
    %v359 = vpop.permute.xlu0 %358
    %v361 = vmul.f32 %v359, %v41
    %363 = vset.pattern.permute.xlu0 0
    %364 = vperm.xlu0 %363, %v84
    %v365 = vpop.permute.xlu0 %364
    %v367 = vmul.f32 %v365, %v43
    %v368 = vadd.f32 %v361, %v367
    %370 = vset.pattern.permute.xlu0 0
    %371 = vperm.xlu0 %370, %v86
    %v372 = vpop.permute.xlu0 %371
    %v374 = vmul.f32 %v372, %v45
    %v375 = vadd.f32 %v368, %v374
    %377 = vset.pattern.permute.xlu0 0
    %378 = vperm.xlu0 %377, %v88
    %v379 = vpop.permute.xlu0 %378
    %v381 = vmul.f32 %v379, %v47
    %v382 = vadd.f32 %v375, %v381
    %384 = vset.pattern.permute.xlu0 0
    %385 = vperm.xlu0 %384, %v90
    %v386 = vpop.permute.xlu0 %385
    %v388 = vmul.f32 %v386, %v49
    %v389 = vadd.f32 %v382, %v388
    %391 = vset.pattern.permute.xlu0 0
    %392 = vperm.xlu0 %391, %v92
    %v393 = vpop.permute.xlu0 %392
    %v395 = vmul.f32 %v393, %v51
    %v396 = vadd.f32 %v389, %v395
    %398 = vset.pattern.permute.xlu0 0
    %399 = vperm.xlu0 %398, %v177
    %v400 = vpop.permute.xlu0 %399
    %v402 = vmul.f32 %v396, %v400
    %v403 = vxor.u32 %v402, 2147483648
    %v404 = vmul.f32 %v403, 1.442695
    %v405 = vpow.pop %v404
    %v406 = vadd.f32 %v405, 1.0
    %v407 = vrcp.pop %v406
    %v408 = vmul.f32 1.0, %v407
    %v409 = vsub.f32 %v408, 0.5
    %411 = vset.pattern.permute.xlu0 0
    %412 = vperm.xlu0 %411, %v94
    %v413 = vpop.permute.xlu0 %412
    %v415 = vmul.f32 %v413, %v41
    %417 = vset.pattern.permute.xlu0 0
    %418 = vperm.xlu0 %417, %v96
    %v419 = vpop.permute.xlu0 %418
    %v421 = vmul.f32 %v419, %v43
    %v422 = vadd.f32 %v415, %v421
    %424 = vset.pattern.permute.xlu0 0
    %425 = vperm.xlu0 %424, %v98
    %v426 = vpop.permute.xlu0 %425
    %v428 = vmul.f32 %v426, %v45
    %v429 = vadd.f32 %v422, %v428
    %431 = vset.pattern.permute.xlu0 0
    %432 = vperm.xlu0 %431, %v100
    %v433 = vpop.permute.xlu0 %432
    %v435 = vmul.f32 %v433, %v47
    %v436 = vadd.f32 %v429, %v435
    %438 = vset.pattern.permute.xlu0 0
    %439 = vperm.xlu0 %438, %v102
    %v440 = vpop.permute.xlu0 %439
    %v442 = vmul.f32 %v440, %v49
    %v443 = vadd.f32 %v436, %v442
    %445 = vset.pattern.permute.xlu0 0
    %446 = vperm.xlu0 %445, %v104
    %v447 = vpop.permute.xlu0 %446
    %v449 = vmul.f32 %v447, %v51
    %v450 = vadd.f32 %v443, %v449
    %452 = vset.pattern.permute.xlu0 0
    %453 = vperm.xlu0 %452, %v179
    %v454 = vpop.permute.xlu0 %453
    %v456 = vmul.f32 %v450, %v454
    %v457 = vadd.f32 %v41, %v43
    %v458 = vadd.f32 %v457, %v45
    %v459 = vadd.f32 %v458, %v47
    %v460 = vadd.f32 %v459, %v49
    %v461 = vadd.f32 %v460, %v51
    %v462 = vmul.f32 %v461, 0.16666667
    %v463 = vsub.f32 %v41, %v462
    %v464 = vmul.f32 %v463, %v463
    %466 = vset.pattern.permute.xlu0 0
    %467 = vperm.xlu0 %466, %v106
    %v468 = vpop.permute.xlu0 %467
    %v470 = vmul.f32 %v468, %v464
    %v471 = vsub.f32 %v43, %v462
    %v472 = vmul.f32 %v471, %v471
    %474 = vset.pattern.permute.xlu0 0
    %475 = vperm.xlu0 %474, %v108
    %v476 = vpop.permute.xlu0 %475
    %v478 = vmul.f32 %v476, %v472
    %v479 = vadd.f32 %v470, %v478
    %v480 = vsub.f32 %v45, %v462
    %v481 = vmul.f32 %v480, %v480
    %483 = vset.pattern.permute.xlu0 0
    %484 = vperm.xlu0 %483, %v110
    %v485 = vpop.permute.xlu0 %484
    %v487 = vmul.f32 %v485, %v481
    %v488 = vadd.f32 %v479, %v487
    %v489 = vsub.f32 %v47, %v462
    %v490 = vmul.f32 %v489, %v489
    %492 = vset.pattern.permute.xlu0 0
    %493 = vperm.xlu0 %492, %v112
    %v494 = vpop.permute.xlu0 %493
    %v496 = vmul.f32 %v494, %v490
    %v497 = vadd.f32 %v488, %v496
    %v498 = vsub.f32 %v49, %v462
    %v499 = vmul.f32 %v498, %v498
    %501 = vset.pattern.permute.xlu0 0
    %502 = vperm.xlu0 %501, %v114
    %v503 = vpop.permute.xlu0 %502
    %v505 = vmul.f32 %v503, %v499
    %v506 = vadd.f32 %v497, %v505
    %v507 = vsub.f32 %v51, %v462
    %v508 = vmul.f32 %v507, %v507
    %510 = vset.pattern.permute.xlu0 0
    %511 = vperm.xlu0 %510, %v116
    %v512 = vpop.permute.xlu0 %511
    %v514 = vmul.f32 %v512, %v508
    %v515 = vadd.f32 %v506, %v514
    %517 = vset.pattern.permute.xlu0 0
    %518 = vperm.xlu0 %517, %v181
    %v519 = vpop.permute.xlu0 %518
    %v521 = vmul.f32 %v515, %v519
    %v522 = vsub.f32 %v32, %v30
    %v523 = vand.u32 2147483647, %v522
    %525 = vset.pattern.permute.xlu0 0
    %526 = vperm.xlu0 %525, %v118
    %v527 = vpop.permute.xlu0 %526
    %v529 = vmul.f32 %v527, %v523
    %v530 = vsub.f32 %v34, %v32
    %v531 = vand.u32 2147483647, %v530
    %533 = vset.pattern.permute.xlu0 0
    %534 = vperm.xlu0 %533, %v120
    %v535 = vpop.permute.xlu0 %534
    %v537 = vmul.f32 %v535, %v531
    %v538 = vadd.f32 %v529, %v537
    %v539 = vsub.f32 %v36, %v34
    %v540 = vand.u32 2147483647, %v539
    %542 = vset.pattern.permute.xlu0 0
    %543 = vperm.xlu0 %542, %v122
    %v544 = vpop.permute.xlu0 %543
    %v546 = vmul.f32 %v544, %v540
    %v547 = vadd.f32 %v538, %v546
    %v548 = vsub.f32 %v38, %v36
    %v549 = vand.u32 2147483647, %v548
    %551 = vset.pattern.permute.xlu0 0
    %552 = vperm.xlu0 %551, %v124
    %v553 = vpop.permute.xlu0 %552
    %v555 = vmul.f32 %v553, %v549
    %v556 = vadd.f32 %v547, %v555
    %v557 = vsub.f32 %v40, %v38
    %v558 = vand.u32 2147483647, %v557
    %560 = vset.pattern.permute.xlu0 0
    %561 = vperm.xlu0 %560, %v126
    %v562 = vpop.permute.xlu0 %561
    %v564 = vmul.f32 %v562, %v558
    %v565 = vadd.f32 %v556, %v564
    %567 = vset.pattern.permute.xlu0 0
    %568 = vperm.xlu0 %567, %v183
    %v569 = vpop.permute.xlu0 %568
    %v571 = vmul.f32 %v565, %v569
    %vm572 = vcmp.ge.f32.partialorder %v49, %v51
    %v573 = vsel %vm572, 4.0, 5.0
    %v574 = vmax.f32 %v49, %v51
    %vm575 = vcmp.ge.f32.partialorder %v47, %v574
    %v576 = vsel %vm575, 3.0, %v573
    %v577 = vmax.f32 %v47, %v574
    %vm578 = vcmp.ge.f32.partialorder %v45, %v577
    %v579 = vsel %vm578, 2.0, %v576
    %v580 = vmax.f32 %v45, %v577
    %vm581 = vcmp.ge.f32.partialorder %v43, %v580
    %v582 = vsel %vm581, 1.0, %v579
    %v583 = vmax.f32 %v43, %v580
    %vm584 = vcmp.ge.f32.partialorder %v41, %v583
    %v585 = vsel %vm584, 0.0, %v582
    %v586 = vmax.f32 %v41, %v583
    %vm587 = vcmp.eq.f32.partialorder %v586, 0.0
    %v588 = vsel %vm587, -1.0, %v585
    %v589 = vmul.f32 %v588, 0.16666667
    %vm590 = vcmp.ge.f32.partialorder %v43, %v41
    %v591 = vsel %vm590, 1.0, 0.0
    %v592 = vmax.f32 %v43, %v41
    %vm593 = vcmp.ge.f32.partialorder %v45, %v592
    %v594 = vsel %vm593, 2.0, %v591
    %v595 = vmax.f32 %v45, %v592
    %vm596 = vcmp.ge.f32.partialorder %v47, %v595
    %v597 = vsel %vm596, 3.0, %v594
    %v598 = vmax.f32 %v47, %v595
    %vm599 = vcmp.ge.f32.partialorder %v49, %v598
    %v600 = vsel %vm599, 4.0, %v597
    %v601 = vmax.f32 %v49, %v598
    %vm602 = vcmp.ge.f32.partialorder %v51, %v601
    %v603 = vsel %vm602, 5.0, %v600
    %v604 = vmax.f32 %v51, %v601
    %vm605 = vcmp.eq.f32.partialorder %v604, 0.0
    %v606 = vsub.f32 5.0, %v603
    %v607 = vsel %vm605, 6.0, %v606
    %v608 = vsub.f32 6.0, %v607
    %v609 = vmul.f32 %v608, 0.16666667
    %v610 = vmul.f32 %v41, 0.0
    %v611 = vmul.f32 %v45, 2.0
    %v612 = vmul.f32 %v47, 3.0
    %v613 = vmul.f32 %v49, 4.0
    %v614 = vmul.f32 %v51, 5.0
    %616 = vset.pattern.permute.xlu0 0
    %617 = vperm.xlu0 %616, %v128
    %v618 = vpop.permute.xlu0 %617
    %v620 = vmul.f32 %v618, %v610
    %622 = vset.pattern.permute.xlu0 0
    %623 = vperm.xlu0 %622, %v130
    %v624 = vpop.permute.xlu0 %623
    %v626 = vmul.f32 %v624, %v43
    %v627 = vadd.f32 %v620, %v626
    %629 = vset.pattern.permute.xlu0 0
    %630 = vperm.xlu0 %629, %v132
    %v631 = vpop.permute.xlu0 %630
    %v633 = vmul.f32 %v631, %v611
    %v634 = vadd.f32 %v627, %v633
    %636 = vset.pattern.permute.xlu0 0
    %637 = vperm.xlu0 %636, %v134
    %v638 = vpop.permute.xlu0 %637
    %v640 = vmul.f32 %v638, %v612
    %v641 = vadd.f32 %v634, %v640
    %643 = vset.pattern.permute.xlu0 0
    %644 = vperm.xlu0 %643, %v136
    %v645 = vpop.permute.xlu0 %644
    %v647 = vmul.f32 %v645, %v613
    %v648 = vadd.f32 %v641, %v647
    %650 = vset.pattern.permute.xlu0 0
    %651 = vperm.xlu0 %650, %v138
    %v652 = vpop.permute.xlu0 %651
    %v654 = vmul.f32 %v652, %v614
    %v655 = vadd.f32 %v648, %v654
    %657 = vset.pattern.permute.xlu0 0
    %658 = vperm.xlu0 %657, %v185
    %v659 = vpop.permute.xlu0 %658
    %v661 = vmul.f32 %v655, %v659
    %v662 = vmul.f32 %v618, %v52
    %v663 = vmul.f32 %v624, %v53
    %v664 = vadd.f32 %v662, %v663
    %v665 = vmul.f32 %v631, %v54
    %v666 = vadd.f32 %v664, %v665
    %v667 = vmul.f32 %v638, %v55
    %v668 = vadd.f32 %v666, %v667
    %v669 = vmul.f32 %v645, %v56
    %v670 = vadd.f32 %v668, %v669
    %v671 = vmul.f32 %v652, %v57
    %v672 = vadd.f32 %v670, %v671
    %v673 = vmul.f32 %v672, %v659
    %v674 = vsub.f32 %v610, %v661
    %v675 = vmul.f32 %v618, %v674
    %v676 = vsub.f32 %v52, %v673
    %v677 = vmul.f32 %v675, %v676
    %v678 = vsub.f32 %v43, %v661
    %v679 = vmul.f32 %v624, %v678
    %v680 = vsub.f32 %v53, %v673
    %v681 = vmul.f32 %v679, %v680
    %v682 = vadd.f32 %v677, %v681
    %v683 = vsub.f32 %v611, %v661
    %v684 = vmul.f32 %v631, %v683
    %v685 = vsub.f32 %v54, %v673
    %v686 = vmul.f32 %v684, %v685
    %v687 = vadd.f32 %v682, %v686
    %v688 = vsub.f32 %v612, %v661
    %v689 = vmul.f32 %v638, %v688
    %v690 = vsub.f32 %v55, %v673
    %v691 = vmul.f32 %v689, %v690
    %v692 = vadd.f32 %v687, %v691
    %v693 = vsub.f32 %v613, %v661
    %v694 = vmul.f32 %v645, %v693
    %v695 = vsub.f32 %v56, %v673
    %v696 = vmul.f32 %v694, %v695
    %v697 = vadd.f32 %v692, %v696
    %v698 = vsub.f32 %v614, %v661
    %v699 = vmul.f32 %v652, %v698
    %v700 = vsub.f32 %v57, %v673
    %v701 = vmul.f32 %v699, %v700
    %v702 = vadd.f32 %v697, %v701
    %v703 = vmul.f32 %v674, %v674
    %v704 = vmul.f32 %v618, %v703
    %v705 = vmul.f32 %v678, %v678
    %v706 = vmul.f32 %v624, %v705
    %v707 = vadd.f32 %v704, %v706
    %v708 = vmul.f32 %v683, %v683
    %v709 = vmul.f32 %v631, %v708
    %v710 = vadd.f32 %v707, %v709
    %v711 = vmul.f32 %v688, %v688
    %v712 = vmul.f32 %v638, %v711
    %v713 = vadd.f32 %v710, %v712
    %v714 = vmul.f32 %v693, %v693
    %v715 = vmul.f32 %v645, %v714
    %v716 = vadd.f32 %v713, %v715
    %v717 = vmul.f32 %v698, %v698
    %v718 = vmul.f32 %v652, %v717
    %v719 = vadd.f32 %v716, %v718
    %v720 = vadd.f32 %v719, 0.01
    %v721 = vrcp.pop %v720
    %v722 = vmul.f32 %v702, %v721
    %vm723 = vcmp.gt.f32.partialorder %v719, 0.0
    %v724 = vsel %vm723, %v721, %v719
    %726 = vset.pattern.permute.xlu0 0
    %727 = vperm.xlu0 %726, %v140
    %v728 = vpop.permute.xlu0 %727
    %v730 = vmul.f32 %v41, %v728
    %v731 = vmul.f32 %v30, 10.0
    %733 = vset.pattern.permute.xlu0 0
    %734 = vperm.xlu0 %733, %v187
    %v735 = vpop.permute.xlu0 %734
    %v737 = vsub.f32 %v731, %v735
    %v738 = vxor.u32 %v737, 2147483648
    %v739 = vmul.f32 %v738, 1.442695
    %v740 = vpow.pop %v739
    %v741 = vadd.f32 %v740, 1.0
    %v742 = vrcp.pop %v741
    %v743 = vmul.f32 1.0, %v742
    %v744 = vmul.f32 %v730, %v743
    %746 = vset.pattern.permute.xlu0 0
    %747 = vperm.xlu0 %746, %v142
    %v748 = vpop.permute.xlu0 %747
    %v750 = vmul.f32 %v43, %v748
    %v751 = vmul.f32 %v32, 10.0
    %v752 = vsub.f32 %v751, %v735
    %v753 = vxor.u32 %v752, 2147483648
    %v754 = vmul.f32 %v753, 1.442695
    %v755 = vpow.pop %v754
    %v756 = vadd.f32 %v755, 1.0
    %v757 = vrcp.pop %v756
    %v758 = vmul.f32 1.0, %v757
    %v759 = vmul.f32 %v750, %v758
    %v760 = vadd.f32 %v744, %v759
    %762 = vset.pattern.permute.xlu0 0
    %763 = vperm.xlu0 %762, %v144
    %v764 = vpop.permute.xlu0 %763
    %v766 = vmul.f32 %v45, %v764
    %v767 = vmul.f32 %v34, 10.0
    %v768 = vsub.f32 %v767, %v735
    %v769 = vxor.u32 %v768, 2147483648
    %v770 = vmul.f32 %v769, 1.442695
    %v771 = vpow.pop %v770
    %v772 = vadd.f32 %v771, 1.0
    %v773 = vrcp.pop %v772
    %v774 = vmul.f32 1.0, %v773
    %v775 = vmul.f32 %v766, %v774
    %v776 = vadd.f32 %v760, %v775
    %778 = vset.pattern.permute.xlu0 0
    %779 = vperm.xlu0 %778, %v146
    %v780 = vpop.permute.xlu0 %779
    %v782 = vmul.f32 %v47, %v780
    %v783 = vmul.f32 %v36, 10.0
    %v784 = vsub.f32 %v783, %v735
    %v785 = vxor.u32 %v784, 2147483648
    %v786 = vmul.f32 %v785, 1.442695
    %v787 = vpow.pop %v786
    %v788 = vadd.f32 %v787, 1.0
    %v789 = vrcp.pop %v788
    %v790 = vmul.f32 1.0, %v789
    %v791 = vmul.f32 %v782, %v790
    %v792 = vadd.f32 %v776, %v791
    %794 = vset.pattern.permute.xlu0 0
    %795 = vperm.xlu0 %794, %v148
    %v796 = vpop.permute.xlu0 %795
    %v798 = vmul.f32 %v49, %v796
    %v799 = vmul.f32 %v38, 10.0
    %v800 = vsub.f32 %v799, %v735
    %v801 = vxor.u32 %v800, 2147483648
    %v802 = vmul.f32 %v801, 1.442695
    %v803 = vpow.pop %v802
    %v804 = vadd.f32 %v803, 1.0
    %v805 = vrcp.pop %v804
    %v806 = vmul.f32 1.0, %v805
    %v807 = vmul.f32 %v798, %v806
    %v808 = vadd.f32 %v792, %v807
    %810 = vset.pattern.permute.xlu0 0
    %811 = vperm.xlu0 %810, %v150
    %v812 = vpop.permute.xlu0 %811
    %v814 = vmul.f32 %v51, %v812
    %v815 = vmul.f32 %v40, 10.0
    %v816 = vsub.f32 %v815, %v735
    %v817 = vxor.u32 %v816, 2147483648
    %v818 = vmul.f32 %v817, 1.442695
    %v819 = vpow.pop %v818
    %v820 = vadd.f32 %v819, 1.0
    %v821 = vrcp.pop %v820
    %v822 = vmul.f32 1.0, %v821
    %v823 = vmul.f32 %v814, %v822
    %v824 = vadd.f32 %v808, %v823
    %v825 = vadd.f32 %v730, %v750
    %v826 = vadd.f32 %v825, %v766
    %v827 = vadd.f32 %v826, %v782
    %v828 = vadd.f32 %v827, %v798
    %v829 = vadd.f32 %v828, %v814
    %831 = vset.pattern.permute.xlu0 0
    %832 = vperm.xlu0 %831, %v152
    %v833 = vpop.permute.xlu0 %832
    %v835 = vmul.f32 %v41, %v833
    %837 = vset.pattern.permute.xlu0 0
    %838 = vperm.xlu0 %837, %v189
    %v839 = vpop.permute.xlu0 %838
    %v841 = vsub.f32 %v839, %v731
    %v842 = vxor.u32 %v841, 2147483648
    %v843 = vmul.f32 %v842, 1.442695
    %v844 = vpow.pop %v843
    %v845 = vadd.f32 %v844, 1.0
    %v846 = vrcp.pop %v845
    %v847 = vmul.f32 1.0, %v846
    %v848 = vmul.f32 %v835, %v847
    %850 = vset.pattern.permute.xlu0 0
    %851 = vperm.xlu0 %850, %v154
    %v852 = vpop.permute.xlu0 %851
    %v854 = vmul.f32 %v43, %v852
    %v855 = vsub.f32 %v839, %v751
    %v856 = vxor.u32 %v855, 2147483648
    %v857 = vmul.f32 %v856, 1.442695
    %v858 = vpow.pop %v857
    %v859 = vadd.f32 %v858, 1.0
    %v860 = vrcp.pop %v859
    %v861 = vmul.f32 1.0, %v860
    %v862 = vmul.f32 %v854, %v861
    %v863 = vadd.f32 %v848, %v862
    %865 = vset.pattern.permute.xlu0 0
    %866 = vperm.xlu0 %865, %v156
    %v867 = vpop.permute.xlu0 %866
    %v869 = vmul.f32 %v45, %v867
    %v870 = vsub.f32 %v839, %v767
    %v871 = vxor.u32 %v870, 2147483648
    %v872 = vmul.f32 %v871, 1.442695
    %v873 = vpow.pop %v872
    %v874 = vadd.f32 %v873, 1.0
    %v875 = vrcp.pop %v874
    %v876 = vmul.f32 1.0, %v875
    %v877 = vmul.f32 %v869, %v876
    %v878 = vadd.f32 %v863, %v877
    %880 = vset.pattern.permute.xlu0 0
    %881 = vperm.xlu0 %880, %v158
    %v882 = vpop.permute.xlu0 %881
    %v884 = vmul.f32 %v47, %v882
    %v885 = vsub.f32 %v839, %v783
    %v886 = vxor.u32 %v885, 2147483648
    %v887 = vmul.f32 %v886, 1.442695
    %v888 = vpow.pop %v887
    %v889 = vadd.f32 %v888, 1.0
    %v890 = vrcp.pop %v889
    %v891 = vmul.f32 1.0, %v890
    %v892 = vmul.f32 %v884, %v891
    %v893 = vadd.f32 %v878, %v892
    %895 = vset.pattern.permute.xlu0 0
    %896 = vperm.xlu0 %895, %v160
    %v897 = vpop.permute.xlu0 %896
    %v899 = vmul.f32 %v49, %v897
    %v900 = vsub.f32 %v839, %v799
    %v901 = vxor.u32 %v900, 2147483648
    %v902 = vmul.f32 %v901, 1.442695
    %v903 = vpow.pop %v902
    %v904 = vadd.f32 %v903, 1.0
    %v905 = vrcp.pop %v904
    %v906 = vmul.f32 1.0, %v905
    %v907 = vmul.f32 %v899, %v906
    %v908 = vadd.f32 %v893, %v907
    %910 = vset.pattern.permute.xlu0 0
    %911 = vperm.xlu0 %910, %v162
    %v912 = vpop.permute.xlu0 %911
    %v914 = vmul.f32 %v51, %v912
    %v915 = vsub.f32 %v839, %v815
    %v916 = vxor.u32 %v915, 2147483648
    %v917 = vmul.f32 %v916, 1.442695
    %v918 = vpow.pop %v917
    %v919 = vadd.f32 %v918, 1.0
    %v920 = vrcp.pop %v919
    %v921 = vmul.f32 1.0, %v920
    %v922 = vmul.f32 %v914, %v921
    %v923 = vadd.f32 %v908, %v922
    %v924 = vadd.f32 %v835, %v854
    %v925 = vadd.f32 %v924, %v869
    %v926 = vadd.f32 %v925, %v884
    %v927 = vadd.f32 %v926, %v899
    %v928 = vadd.f32 %v927, %v914
    %v929 = vadd.f32 %v829, 0.01
    %v930 = vrcp.pop %v929
    %v931 = vmul.f32 %v824, %v930
    %v932 = vadd.f32 %v928, 0.01
    %v933 = vrcp.pop %v932
    %v934 = vmul.f32 %v923, %v933
    %v935 = vld [vmem:[%s2] sm:$0xff]
    %v936 = vld [vmem:[%s2 + $0x8] sm:$0x3]
    %v937 = vld [vmem:[%s6] sm:$0xf]
    %939 = vset.pattern.permute.xlu0 0
    %940 = vperm.xlu0 %939, %v937
    %v941 = vpop.permute.xlu0 %940
    %v943 = vmul.f32 %v941, %v236
    %s944 = scalar_lea.vmem %s6, 4
    %v945 = vld [vmem:[%s944] sm:$0xf]
    %947 = vset.pattern.permute.xlu0 0
    %948 = vperm.xlu0 %947, %v945
    %v949 = vpop.permute.xlu0 %948
    %v951 = vmul.f32 %v949, %v355
    %v952 = vadd.f32 %v943, %v951
    %s953 = scalar_lea.vmem %s6, 8
    %v954 = vld [vmem:[%s953] sm:$0xf]
    %956 = vset.pattern.permute.xlu0 0
    %957 = vperm.xlu0 %956, %v954
    %v958 = vpop.permute.xlu0 %957
    %v960 = vmul.f32 %v958, %v409
    %v961 = vadd.f32 %v952, %v960
    %s962 = scalar_lea.vmem %s6, 12
    %v963 = vld [vmem:[%s962] sm:$0xf]
    %965 = vset.pattern.permute.xlu0 0
    %966 = vperm.xlu0 %965, %v963
    %v967 = vpop.permute.xlu0 %966
    %v969 = vmul.f32 %v967, %v456
    %v970 = vadd.f32 %v961, %v969
    %s971 = scalar_lea.vmem %s6, 16
    %v972 = vld [vmem:[%s971] sm:$0xf]
    %974 = vset.pattern.permute.xlu0 0
    %975 = vperm.xlu0 %974, %v972
    %v976 = vpop.permute.xlu0 %975
    %v978 = vmul.f32 %v976, %v521
    %v979 = vadd.f32 %v970, %v978
    %s980 = scalar_lea.vmem %s6, 20
    %v981 = vld [vmem:[%s980] sm:$0xf]
    %983 = vset.pattern.permute.xlu0 0
    %984 = vperm.xlu0 %983, %v981
    %v985 = vpop.permute.xlu0 %984
    %v987 = vmul.f32 %v985, %v571
    %v988 = vadd.f32 %v979, %v987
    %s989 = scalar_lea.vmem %s6, 24
    %v990 = vld [vmem:[%s989] sm:$0xf]
    %992 = vset.pattern.permute.xlu0 0
    %993 = vperm.xlu0 %992, %v990
    %v994 = vpop.permute.xlu0 %993
    %v996 = vmul.f32 %v994, %v722
    %v997 = vadd.f32 %v988, %v996
    %s998 = scalar_lea.vmem %s6, 28
    %v999 = vld [vmem:[%s998] sm:$0xf]
    %1001 = vset.pattern.permute.xlu0 0
    %1002 = vperm.xlu0 %1001, %v999
    %v1003 = vpop.permute.xlu0 %1002
    %v1005 = vmul.f32 %v1003, %v724
    %v1006 = vadd.f32 %v997, %v1005
    %s1007 = scalar_lea.vmem %s6, 32
    %v1008 = vld [vmem:[%s1007] sm:$0xf]
    %1010 = vset.pattern.permute.xlu0 0
    %1011 = vperm.xlu0 %1010, %v1008
    %v1012 = vpop.permute.xlu0 %1011
    %v1014 = vmul.f32 %v1012, %v589
    %v1015 = vadd.f32 %v1006, %v1014
    %s1016 = scalar_lea.vmem %s6, 36
    %v1017 = vld [vmem:[%s1016] sm:$0xf]
    %1019 = vset.pattern.permute.xlu0 0
    %1020 = vperm.xlu0 %1019, %v1017
    %v1021 = vpop.permute.xlu0 %1020
    %v1023 = vmul.f32 %v1021, %v609
    %v1024 = vadd.f32 %v1015, %v1023
    %s1025 = scalar_lea.vmem %s6, 40
    %v1026 = vld [vmem:[%s1025] sm:$0xf]
    %1028 = vset.pattern.permute.xlu0 0
    %1029 = vperm.xlu0 %1028, %v1026
    %v1030 = vpop.permute.xlu0 %1029
    %v1032 = vmul.f32 %v1030, %v931
    %v1033 = vadd.f32 %v1024, %v1032
    %s1034 = scalar_lea.vmem %s6, 44
    %v1035 = vld [vmem:[%s1034] sm:$0xf]
    %1037 = vset.pattern.permute.xlu0 0
    %1038 = vperm.xlu0 %1037, %v1035
    %v1039 = vpop.permute.xlu0 %1038
    %v1041 = vmul.f32 %v1039, %v934
    %v1042 = vadd.f32 %v1033, %v1041
    %v1043 = vld [vmem:[%s5] sm:$0xff]
    %v1044 = vld [vmem:[%s5 + $0x8] sm:$0x3]
    %1046 = vset.pattern.permute.xlu0 0
    %1047 = vperm.xlu0 %1046, %v1043
    %v1048 = vpop.permute.xlu0 %1047
    %1051 = vset.pattern.permute.xlu0 0
    %1052 = vperm.xlu0 %1051, %v1044
    %v1053 = vpop.permute.xlu0 %1052
    %v1055 = vmul.f32 %v1048, %v935
    %v1056 = vmul.f32 %v1053, %v936
    %vm1057 = vcmask 1043456
    %v1058 = vsel %vm1057, %v1042, 0.0
    %v1059 = vrot.slane %v1058, 4
    %v1060 = vadd.f32 %v1058, %v1059
    %v1061 = vrot.slane %v1060, 2
    %v1062 = vadd.f32 %v1060, %v1061
    %v1063 = vrot.slane %v1062, 1
    %v1064 = vadd.f32 %v1062, %v1063
    %vm1065 = vcmask 1041408
    %v1066 = vsel %vm1065, %v1056, 0.0
    %v1067 = vadd.f32 %v1055, %v1066
    %v1068 = vrot.slane %v1067, 4
    %v1069 = vadd.f32 %v1067, %v1068
    %v1070 = vrot.slane %v1069, 2
    %v1071 = vadd.f32 %v1069, %v1070
    %v1072 = vrot.slane %v1071, 1
    %v1073 = vadd.f32 %v1071, %v1072
    %v1074 = vadd.f32 %v1064, %v1073
    %s1075 = scalar_lea.vmem %s6, 48
    %v1076 = vld [vmem:[%s1075] sm:$0xf]
    %1078 = vset.pattern.permute.xlu0 0
    %1079 = vperm.xlu0 %1078, %v1076
    %v1080 = vpop.permute.xlu0 %1079
    %v1082 = vmul.f32 %v1080, %v236
    %s1083 = scalar_lea.vmem %s6, 52
    %v1084 = vld [vmem:[%s1083] sm:$0xf]
    %1086 = vset.pattern.permute.xlu0 0
    %1087 = vperm.xlu0 %1086, %v1084
    %v1088 = vpop.permute.xlu0 %1087
    %v1090 = vmul.f32 %v1088, %v355
    %v1091 = vadd.f32 %v1082, %v1090
    %s1092 = scalar_lea.vmem %s6, 56
    %v1093 = vld [vmem:[%s1092] sm:$0xf]
    %1095 = vset.pattern.permute.xlu0 0
    %1096 = vperm.xlu0 %1095, %v1093
    %v1097 = vpop.permute.xlu0 %1096
    %v1099 = vmul.f32 %v1097, %v409
    %v1100 = vadd.f32 %v1091, %v1099
    %s1101 = scalar_lea.vmem %s6, 60
    %v1102 = vld [vmem:[%s1101] sm:$0xf]
    %1104 = vset.pattern.permute.xlu0 0
    %1105 = vperm.xlu0 %1104, %v1102
    %v1106 = vpop.permute.xlu0 %1105
    %v1108 = vmul.f32 %v1106, %v456
    %v1109 = vadd.f32 %v1100, %v1108
    %s1110 = scalar_lea.vmem %s6, 64
    %v1111 = vld [vmem:[%s1110] sm:$0xf]
    %1113 = vset.pattern.permute.xlu0 0
    %1114 = vperm.xlu0 %1113, %v1111
    %v1115 = vpop.permute.xlu0 %1114
    %v1117 = vmul.f32 %v1115, %v521
    %v1118 = vadd.f32 %v1109, %v1117
    %s1119 = scalar_lea.vmem %s6, 68
    %v1120 = vld [vmem:[%s1119] sm:$0xf]
    %1122 = vset.pattern.permute.xlu0 0
    %1123 = vperm.xlu0 %1122, %v1120
    %v1124 = vpop.permute.xlu0 %1123
    %v1126 = vmul.f32 %v1124, %v571
    %v1127 = vadd.f32 %v1118, %v1126
    %s1128 = scalar_lea.vmem %s6, 72
    %v1129 = vld [vmem:[%s1128] sm:$0xf]
    %1131 = vset.pattern.permute.xlu0 0
    %1132 = vperm.xlu0 %1131, %v1129
    %v1133 = vpop.permute.xlu0 %1132
    %v1135 = vmul.f32 %v1133, %v722
    %v1136 = vadd.f32 %v1127, %v1135
    %s1137 = scalar_lea.vmem %s6, 76
    %v1138 = vld [vmem:[%s1137] sm:$0xf]
    %1140 = vset.pattern.permute.xlu0 0
    %1141 = vperm.xlu0 %1140, %v1138
    %v1142 = vpop.permute.xlu0 %1141
    %v1144 = vmul.f32 %v1142, %v724
    %v1145 = vadd.f32 %v1136, %v1144
    %s1146 = scalar_lea.vmem %s6, 80
    %v1147 = vld [vmem:[%s1146] sm:$0xf]
    %1149 = vset.pattern.permute.xlu0 0
    %1150 = vperm.xlu0 %1149, %v1147
    %v1151 = vpop.permute.xlu0 %1150
    %v1153 = vmul.f32 %v1151, %v589
    %v1154 = vadd.f32 %v1145, %v1153
    %s1155 = scalar_lea.vmem %s6, 84
    %v1156 = vld [vmem:[%s1155] sm:$0xf]
    %1158 = vset.pattern.permute.xlu0 0
    %1159 = vperm.xlu0 %1158, %v1156
    %v1160 = vpop.permute.xlu0 %1159
    %v1162 = vmul.f32 %v1160, %v609
    %v1163 = vadd.f32 %v1154, %v1162
    %s1164 = scalar_lea.vmem %s6, 88
    %v1165 = vld [vmem:[%s1164] sm:$0xf]
    %1167 = vset.pattern.permute.xlu0 0
    %1168 = vperm.xlu0 %1167, %v1165
    %v1169 = vpop.permute.xlu0 %1168
    %v1171 = vmul.f32 %v1169, %v931
    %v1172 = vadd.f32 %v1163, %v1171
    %s1173 = scalar_lea.vmem %s6, 92
    %v1174 = vld [vmem:[%s1173] sm:$0xf]
    %1176 = vset.pattern.permute.xlu0 0
    %1177 = vperm.xlu0 %1176, %v1174
    %v1178 = vpop.permute.xlu0 %1177
    %v1180 = vmul.f32 %v1178, %v934
    %v1181 = vadd.f32 %v1172, %v1180
    %s1182 = scalar_lea.vmem %s5, 16
    %v1183 = vld [vmem:[%s1182] sm:$0xff]
    %v1184 = vld [vmem:[%s1182 + $0x8] sm:$0x3]
    %1186 = vset.pattern.permute.xlu0 0
    %1187 = vperm.xlu0 %1186, %v1183
    %v1188 = vpop.permute.xlu0 %1187
    %1191 = vset.pattern.permute.xlu0 0
    %1192 = vperm.xlu0 %1191, %v1184
    %v1193 = vpop.permute.xlu0 %1192
    %v1195 = vmul.f32 %v1188, %v935
    %v1196 = vmul.f32 %v1193, %v936
    %v1197 = vsel %vm1057, %v1181, 0.0
    %v1198 = vrot.slane %v1197, 4
    %v1199 = vadd.f32 %v1197, %v1198
    %v1200 = vrot.slane %v1199, 2
    %v1201 = vadd.f32 %v1199, %v1200
    %v1202 = vrot.slane %v1201, 1
    %v1203 = vadd.f32 %v1201, %v1202
    %v1204 = vsel %vm1065, %v1196, 0.0
    %v1205 = vadd.f32 %v1195, %v1204
    %v1206 = vrot.slane %v1205, 4
    %v1207 = vadd.f32 %v1205, %v1206
    %v1208 = vrot.slane %v1207, 2
    %v1209 = vadd.f32 %v1207, %v1208
    %v1210 = vrot.slane %v1209, 1
    %v1211 = vadd.f32 %v1209, %v1210
    %v1212 = vadd.f32 %v1203, %v1211
    %vm1213 = vcmask 1040384
    %v1214 = vsel %vm1213, %v1074, %v1212
    %v1215 = vld [vmem:[%s7] sm:$0x3]
    %1217 = vset.pattern.permute.xlu0 0
    %1218 = vperm.xlu0 %1217, %v1215
    %v1219 = vpop.permute.xlu0 %1218
    %v1221 = vadd.f32 %v1214, %v1219
    %1222 = vst [vmem:[#allocation2] sm:$0x3] %v1221
    // Predicated region
    $region34: #{tpu_custom_call.1} parent=1 // pred_check
      _
    $region35: #{tpu_custom_call.1} parent=1 // pred_check_branch
      %1224 = sbr.rel (0) target = $region37
    $region36: #{tpu_custom_call.1} parent=1 // pred_region
      %s1226 = ssub.s32 32, 32
      %1227 = vsyncadd [#allocation3], %s1226
      %s1229 = sshll.u32 [#allocation2], 4
      %s1230 = int_to_ptr.vmem [resolvable:$true] %s1229
      %1232 = dma.vmem_to_hbm [thread:$0]  %s1230, 32, %s8, [#allocation3]
    $region37: #{tpu_custom_call.1} parent=1 // pred_fallthru
      _
    // Predicated region
    $region38: #{tpu_custom_call.1} parent=1 // pred_check
      _
    $region39: #{tpu_custom_call.1} parent=1 // pred_check_branch
      %1234 = sbr.rel (0) target = $region41
    $region40: #{tpu_custom_call.1} parent=1 // pred_region
      %1235 = dma.done [#allocation3], 32
    $region41: #{tpu_custom_call.1} parent=1 // pred_fallthru
      _
    %1236 = vsyncpa [#allocation3], 1

</llo_original>
